<compile_context>
chip_gen: v6e
topology: v6e:2x2x1
jax: 0.10.0
libtpu: 0.0.40
codegen_flags: <defaults>
</compile_context>

<pallas_src>
import functools
import math

import jax
import jax.numpy as jnp
from jax.experimental import pallas as pl
from jax.experimental.pallas import tpu as pltpu

LOG_STD_MAX = 2.0
LOG_STD_MIN = -20.0

_HALF_LOG_2PI = 0.5 * math.log(2.0 * math.pi)
_LOG2 = math.log(2.0)
_LANES = 128
_SUBLANES = 8


def _softplus(x):
    # numerically stable log(1 + exp(x))
    return jnp.maximum(x, 0.0) + jnp.log(1.0 + jnp.exp(-jnp.abs(x)))


# --------------------------- fused policy kernel ------------------------------
def policy_kernel(s_ref, feat_ref, eps_ref, w_ref, out_ref, *,
                  layout, T, Bp, B, H, A):
    # s_ref   : (T*Bp, F)   time-major input, each timestep padded to Bp=8 rows
    # feat_ref: (B, n_hc)   handcrafted features (already squeezed)
    # eps_ref : (B, A)      N(0,1) reparameterization noise
    # w_ref   : (rows, 128) single packed weight/bias slab (see layout)
    # out_ref : (B, 4A)     packed [mu | std | action | logp]
    def blk(name):
        r0, r, c = layout[name]          # static python ints -> free views
        return w_ref[r0:r0 + r, 0:c]

    # ---- load weights for the recurrence ONCE (outside the unrolled loop) ---
    wih = blk("wih")        # (F, 4H)
    whh = blk("whh")        # (H, 4H)
    blstm = blk("blstm")    # (1, 4H)

    # ---- FeatureExtractor: single-layer LSTM, h0 = c0 = 0 -------------------
    # Hoisted input projection: ONE matmul covering all timesteps, bias folded
    # in once.  Per-step slices below are (8,128)-aligned (row offset t*8).
    gx = jnp.dot(s_ref[...], wih, preferred_element_type=jnp.float32) + blstm  # (T*Bp, 4H)

    h = jnp.zeros((Bp, H), jnp.float32)
    c = jnp.zeros((Bp, H), jnp.float32)

    # T small & static -> fully unrolled; per step only h @ whh hits the MXU.
    for t in range(T):
        gates = gx[t * Bp:(t + 1) * Bp, :] + jnp.dot(
            h, whh, preferred_element_type=jnp.float32)          # (Bp, 4H)
        # 2 transcendental passes on the full (Bp,4H) vreg instead of 4 on
        # 16-lane sub-slices; gate order i, f, g, o (PyTorch).
        sig = jax.nn.sigmoid(gates)
        tnh = jnp.tanh(gates)
        i_g = sig[:, 0 * H:1 * H]
        f_g = sig[:, 1 * H:2 * H]
        g_g = tnh[:, 2 * H:3 * H]
        o_g = sig[:, 3 * H:4 * H]
        c = f_g * c + i_g * g_g
        h = o_g * jnp.tanh(c)

    hb = h[0:B, :]                    # drop the padding rows (offset 0, free)
    feat = feat_ref[...]              # (B, n_hc)

    # ---- ActionModule --------------------------------------------------------
    # fc_layer1(concat([lstm_out, feat])) without the lane concat: split weights.
    h1 = jnp.maximum(
        jnp.dot(hb, blk("w1a"), preferred_element_type=jnp.float32)
        + jnp.dot(feat, blk("w1b"), preferred_element_type=jnp.float32)
        + blk("b1"), 0.0)
    h2 = jnp.maximum(
        jnp.dot(h1, blk("w2"), preferred_element_type=jnp.float32) + blk("b2"), 0.0)
    h3 = jnp.maximum(
        jnp.dot(h2, blk("w3"), preferred_element_type=jnp.float32) + blk("b3"), 0.0)

    # Fused mu / sigma heads: one matmul, then lane split.
    heads = (jnp.dot(h3, blk("whead"), preferred_element_type=jnp.float32)
             + blk("bhead"))                                  # (B, 2A)
    mu = heads[:, 0:A]
    log_std = jnp.clip(heads[:, A:2 * A], LOG_STD_MIN, LOG_STD_MAX)
    std = jnp.exp(log_std)

    # rsample: mu + std * eps  (eps ~ N(0,1), generated outside the kernel)
    ga = mu + std * eps_ref[...]
    action = jnp.tanh(ga)

    # PyTorch semantics: log_prob evaluated at gaussian_action[0] broadcast
    # against every row's (mu, std); no sum over action dims.
    ga0 = ga[0:1, :]
    logp = -((ga0 - mu) ** 2) / (2.0 * std * std) - log_std - _HALF_LOG_2PI
    logp = logp - 2.0 * (_LOG2 - ga0 - _softplus(-2.0 * ga0))

    # Packed output, written with static lane-slice stores (no lane concat).
    out_ref[:, 0 * A:1 * A] = mu
    out_ref[:, 1 * A:2 * A] = std
    out_ref[:, 2 * A:3 * A] = action
    out_ref[:, 3 * A:4 * A] = logp


# -------------------------- parameter preparation ------------------------------
def prepare_policy_params(lstm_params, mlp_params, n_hidden):
    """One-time repacking: transposes, mu/sigma head fusion, fc1 split, and
    packing of EVERY weight/bias into a single (rows, 128) f32 slab so the
    kernel pulls all parameters with ONE HBM->VMEM DMA.  Each block's row
    offset is a multiple of 8 and its lane offset is 0, so every in-kernel
    view is (8,128)-tile aligned."""
    wih = jnp.transpose(lstm_params["w_ih"]).astype(jnp.float32)          # (F, 4H)
    whh = jnp.transpose(lstm_params["w_hh"]).astype(jnp.float32)          # (H, 4H)
    blstm = (lstm_params["b_ih"] + lstm_params["b_hh"]).reshape(1, -1).astype(jnp.float32)
    w1 = mlp_params["w1"].astype(jnp.float32)                            # (FEAT, LH)

    blocks = {
        "wih": wih,
        "whh": whh,
        "blstm": blstm,
        "w1a": w1[:n_hidden, :],
        "w1b": w1[n_hidden:, :],
        "b1": mlp_params["b1"].astype(jnp.float32),
        "w2": mlp_params["w2"].astype(jnp.float32),
        "b2": mlp_params["b2"].astype(jnp.float32),
        "w3": mlp_params["w3"].astype(jnp.float32),
        "b3": mlp_params["b3"].astype(jnp.float32),
        "whead": jnp.concatenate([mlp_params["wmu"], mlp_params["wsg"]],
                                 axis=1).astype(jnp.float32),
        "bhead": jnp.concatenate([mlp_params["bmu"], mlp_params["bsg"]],
                                 axis=1).astype(jnp.float32),
    }

    layout = {}
    padded = []
    off = 0
    for name, w in blocks.items():
        r, c = w.shape
        assert c <= _LANES, f"{name} lane dim {c} > {_LANES}"
        rp = -(-r // _SUBLANES) * _SUBLANES
        layout[name] = (off, r, c)                         # static python ints
        padded.append(jnp.zeros((rp, _LANES), jnp.float32).at[:r, :c].set(w))
        off += rp
    wslab = jnp.concatenate(padded, axis=0)                # (rows, 128)
    return wslab, layout


# ------------------------------- wrapper --------------------------------------
def make_policy_forward(layout):
    """Build a jitted forward closed over the static slab layout."""
    F = layout["wih"][1]
    H = layout["whh"][1]
    n_hc = layout["w1b"][1]
    LH = layout["b1"][2]
    A = layout["bhead"][2] // 2
    vmem = pltpu.MemorySpace.VMEM

    @jax.jit
    def forward(s, feat, eps, wslab):
        # s: (B, T, F) batch_first; feat: (B, 1, n_hc); eps: (B, A). mode='batch'.
        B, T, _ = s.shape
        Bp = -(-B // _SUBLANES) * _SUBLANES   # pad each timestep to 8 sublanes

        # Time-major, sublane-padded input slab (T*Bp, F); tiny XLA copy in HBM.
        s_tm = jnp.transpose(s, (1, 0, 2))                    # (T, B, F)
        if Bp != B:
            s_tm = jnp.pad(s_tm, ((0, 0), (0, Bp - B), (0, 0)))
        s2d = s_tm.reshape(T * Bp, F)
        feat2 = jnp.reshape(feat, (B, n_hc))

        flops = 2 * (T * Bp * F * 4 * H + T * Bp * H * 4 * H
                     + B * (H + n_hc) * LH + 2 * B * LH * LH + B * LH * 2 * A)
        transc = T * Bp * 9 * H + 4 * B * A
        bytes_acc = 4 * (wslab.size + T * Bp * F + B * n_hc + B * A + B * 4 * A)

        kern = functools.partial(policy_kernel, layout=layout,
                                 T=T, Bp=Bp, B=B, H=H, A=A)
        packed = pl.pallas_call(
            kern,
            out_shape=jax.ShapeDtypeStruct((B, 4 * A), jnp.float32),
            in_specs=[pl.BlockSpec(memory_space=vmem)] * 4,
            out_specs=pl.BlockSpec(memory_space=vmem),
            cost_estimate=pl.CostEstimate(flops=flops, transcendentals=transc,
                                          bytes_accessed=bytes_acc),
        )(s2d, feat2, eps, wslab)

        mu = packed[:, 0 * A:1 * A]
        std = packed[:, 1 * A:2 * A]
        action = packed[:, 2 * A:3 * A]
        logp = packed[:, 3 * A:4 * A]
        return mu, std, action, logp

    return forward


def _uniform(key, shape, bound):
    return jax.random.uniform(key, shape, jnp.float32, minval=-bound, maxval=bound)


if __name__ == "__main__":
    # args: n_features=8, n_handcrafted_features=4, use_handcraft=1,
    #       n_action=2, n_hidden=16, n_rnn_layers=1, rnn_directions=1,
    #       bidirectional=False
    B, T = 2, 8
    N_FEATURES = 8
    N_HC = 4
    N_HIDDEN = 16
    N_ACTION = 2
    FEAT_DIM = N_HIDDEN * 1 * 1 + N_HC * 1        # 20
    LAST_HIDDEN = FEAT_DIM * 2                    # 40

    key = jax.random.PRNGKey(0)
    keys = jax.random.split(key, 20)

    # LSTM params (PyTorch-style uniform(-1/sqrt(H), 1/sqrt(H)), gate order i,f,g,o)
    kb = 1.0 / math.sqrt(N_HIDDEN)
    lstm_params = {
        "w_ih": _uniform(keys[0], (4 * N_HIDDEN, N_FEATURES), kb),
        "w_hh": _uniform(keys[1], (4 * N_HIDDEN, N_HIDDEN), kb),
        "b_ih": _uniform(keys[2], (4 * N_HIDDEN,), kb),
        "b_hh": _uniform(keys[3], (4 * N_HIDDEN,), kb),
    }

    def lin(kw, kbk, fan_in, fan_out):
        bnd = 1.0 / math.sqrt(fan_in)
        # stored pre-transposed: (fan_in, fan_out); biases as (1, fan_out)
        return (_uniform(kw, (fan_in, fan_out), bnd),
                _uniform(kbk, (1, fan_out), bnd))

    w1, b1 = lin(keys[4], keys[5], FEAT_DIM, LAST_HIDDEN)
    w2, b2 = lin(keys[6], keys[7], LAST_HIDDEN, LAST_HIDDEN)
    w3, b3 = lin(keys[8], keys[9], LAST_HIDDEN, LAST_HIDDEN)
    wmu, bmu = lin(keys[10], keys[11], LAST_HIDDEN, N_ACTION)
    wsg, bsg = lin(keys[12], keys[13], LAST_HIDDEN, N_ACTION)
    mlp_params = {"w1": w1, "b1": b1, "w2": w2, "b2": b2, "w3": w3, "b3": b3,
                  "wmu": wmu, "bmu": bmu, "wsg": wsg, "bsg": bsg}

    # One-time parameter repacking into a single weight slab (outside forward).
    wslab, layout = prepare_policy_params(lstm_params, mlp_params, N_HIDDEN)
    forward = make_policy_forward(layout)

    # Inputs
    s = jax.random.normal(keys[14], (B, T, N_FEATURES), jnp.float32)
    feat = jax.random.normal(keys[15], (B, 1, N_HC), jnp.float32)
    # Reparameterization noise for dst.rsample() (regenerate per call in training).
    eps = jax.random.normal(keys[16], (B, N_ACTION), jnp.float32)

    mu, sigma, action, log_prob = forward(s, feat, eps, wslab)
    jax.block_until_ready((mu, sigma, action, log_prob))

    assert mu.shape == (B, N_ACTION)
    assert sigma.shape == (B, N_ACTION)
    assert action.shape == (B, N_ACTION)
    assert log_prob.shape == (B, N_ACTION)
    assert bool(jnp.all(jnp.isfinite(mu)))
    assert bool(jnp.all(sigma > 0.0))
    assert bool(jnp.all(jnp.abs(action) <= 1.0))
    assert bool(jnp.all(jnp.isfinite(log_prob)))
    print("KERNEL_OK")
</pallas_src>

<mosaic_0001>
module attributes {stable_mosaic.version = 11 : i64} {
  func.func @policy_kernel(%arg0: memref<64x8xf32, #tpu.memory_space<vmem>>, %arg1: memref<2x4xf32, #tpu.memory_space<vmem>>, %arg2: memref<2x2xf32, #tpu.memory_space<vmem>>, %arg3: memref<208x128xf32, #tpu.memory_space<vmem>>, %arg4: memref<2x8xf32, #tpu.memory_space<vmem>>) attributes {dimension_semantics = [], scalar_prefetch = 0 : i64, scratch_operands = 0 : i64, tpu.core_type = #tpu.core_type<tc>} {
    %c0 = arith.constant 0 : index
    %c0_0 = arith.constant 0 : index
    %0 = vector.load %arg3[%c0, %c0_0] : memref<208x128xf32, #tpu.memory_space<vmem>>, vector<8x64xf32>
    %c8 = arith.constant 8 : index
    %c0_1 = arith.constant 0 : index
    %1 = vector.load %arg3[%c8, %c0_1] : memref<208x128xf32, #tpu.memory_space<vmem>>, vector<16x64xf32>
    %c24 = arith.constant 24 : index
    %c0_2 = arith.constant 0 : index
    %2 = vector.load %arg3[%c24, %c0_2] : memref<208x128xf32, #tpu.memory_space<vmem>>, vector<1x64xf32>
    %c0_3 = arith.constant 0 : index
    %c0_4 = arith.constant 0 : index
    %3 = vector.load %arg0[%c0_3, %c0_4] : memref<64x8xf32, #tpu.memory_space<vmem>>, vector<64x8xf32>
    %cst = arith.constant dense<0.000000e+00> : vector<64x64xf32>
    %4 = tpu.matmul %3, %0, %cst {dimension_numbers = #tpu.dot_dimension_numbers<[1], [0], [0], [1], [0, 0, 1, 1], [], []>} : vector<64x8xf32>, vector<8x64xf32>, vector<64x64xf32> -> vector<64x64xf32>
    %5 = vector.broadcast %2 : vector<1x64xf32> to vector<64x64xf32>
    %6 = arith.addf %4, %5 : vector<64x64xf32>
    %cst_5 = arith.constant 0.000000e+00 : f32
    %7 = vector.broadcast %cst_5 : f32 to vector<8x16xf32>
    %cst_6 = arith.constant 0.000000e+00 : f32
    %8 = vector.broadcast %cst_6 : f32 to vector<8x16xf32>
    %9 = vector.extract_strided_slice %6 {offsets = [0, 0], sizes = [8, 64], strides = [1, 1]} : vector<64x64xf32> to vector<8x64xf32>
    %cst_7 = arith.constant dense<0.000000e+00> : vector<8x64xf32>
    %10 = tpu.matmul %7, %1, %cst_7 {dimension_numbers = #tpu.dot_dimension_numbers<[1], [0], [0], [1], [0, 0, 1, 1], [], []>} : vector<8x16xf32>, vector<16x64xf32>, vector<8x64xf32> -> vector<8x64xf32>
    %11 = arith.addf %9, %10 : vector<8x64xf32>
    %12 = arith.negf %11 : vector<8x64xf32>
    %13 = math.exp %12 : vector<8x64xf32>
    %cst_8 = arith.constant 1.000000e+00 : f32
    %14 = vector.broadcast %cst_8 : f32 to vector<8x64xf32>
    %15 = arith.addf %14, %13 : vector<8x64xf32>
    %16 = arith.divf %14, %15 : vector<8x64xf32>
    %17 = math.tanh %11 : vector<8x64xf32>
    %18 = vector.extract_strided_slice %16 {offsets = [0, 0], sizes = [8, 16], strides = [1, 1]} : vector<8x64xf32> to vector<8x16xf32>
    %19 = vector.extract_strided_slice %16 {offsets = [0, 16], sizes = [8, 16], strides = [1, 1]} : vector<8x64xf32> to vector<8x16xf32>
    %20 = vector.extract_strided_slice %17 {offsets = [0, 32], sizes = [8, 16], strides = [1, 1]} : vector<8x64xf32> to vector<8x16xf32>
    %21 = vector.extract_strided_slice %16 {offsets = [0, 48], sizes = [8, 16], strides = [1, 1]} : vector<8x64xf32> to vector<8x16xf32>
    %22 = arith.mulf %19, %8 : vector<8x16xf32>
    %23 = arith.mulf %18, %20 : vector<8x16xf32>
    %24 = arith.addf %22, %23 : vector<8x16xf32>
    %25 = math.tanh %24 : vector<8x16xf32>
    %26 = arith.mulf %21, %25 : vector<8x16xf32>
    %27 = vector.extract_strided_slice %6 {offsets = [8, 0], sizes = [8, 64], strides = [1, 1]} : vector<64x64xf32> to vector<8x64xf32>
    %cst_9 = arith.constant dense<0.000000e+00> : vector<8x64xf32>
    %28 = tpu.matmul %26, %1, %cst_9 {dimension_numbers = #tpu.dot_dimension_numbers<[1], [0], [0], [1], [0, 0, 1, 1], [], []>} : vector<8x16xf32>, vector<16x64xf32>, vector<8x64xf32> -> vector<8x64xf32>
    %29 = arith.addf %27, %28 : vector<8x64xf32>
    %30 = arith.negf %29 : vector<8x64xf32>
    %31 = math.exp %30 : vector<8x64xf32>
    %cst_10 = arith.constant 1.000000e+00 : f32
    %32 = vector.broadcast %cst_10 : f32 to vector<8x64xf32>
    %33 = arith.addf %32, %31 : vector<8x64xf32>
    %34 = arith.divf %32, %33 : vector<8x64xf32>
    %35 = math.tanh %29 : vector<8x64xf32>
    %36 = vector.extract_strided_slice %34 {offsets = [0, 0], sizes = [8, 16], strides = [1, 1]} : vector<8x64xf32> to vector<8x16xf32>
    %37 = vector.extract_strided_slice %34 {offsets = [0, 16], sizes = [8, 16], strides = [1, 1]} : vector<8x64xf32> to vector<8x16xf32>
    %38 = vector.extract_strided_slice %35 {offsets = [0, 32], sizes = [8, 16], strides = [1, 1]} : vector<8x64xf32> to vector<8x16xf32>
    %39 = vector.extract_strided_slice %34 {offsets = [0, 48], sizes = [8, 16], strides = [1, 1]} : vector<8x64xf32> to vector<8x16xf32>
    %40 = arith.mulf %37, %24 : vector<8x16xf32>
    %41 = arith.mulf %36, %38 : vector<8x16xf32>
    %42 = arith.addf %40, %41 : vector<8x16xf32>
    %43 = math.tanh %42 : vector<8x16xf32>
    %44 = arith.mulf %39, %43 : vector<8x16xf32>
    %45 = vector.extract_strided_slice %6 {offsets = [16, 0], sizes = [8, 64], strides = [1, 1]} : vector<64x64xf32> to vector<8x64xf32>
    %cst_11 = arith.constant dense<0.000000e+00> : vector<8x64xf32>
    %46 = tpu.matmul %44, %1, %cst_11 {dimension_numbers = #tpu.dot_dimension_numbers<[1], [0], [0], [1], [0, 0, 1, 1], [], []>} : vector<8x16xf32>, vector<16x64xf32>, vector<8x64xf32> -> vector<8x64xf32>
    %47 = arith.addf %45, %46 : vector<8x64xf32>
    %48 = arith.negf %47 : vector<8x64xf32>
    %49 = math.exp %48 : vector<8x64xf32>
    %cst_12 = arith.constant 1.000000e+00 : f32
    %50 = vector.broadcast %cst_12 : f32 to vector<8x64xf32>
    %51 = arith.addf %50, %49 : vector<8x64xf32>
    %52 = arith.divf %50, %51 : vector<8x64xf32>
    %53 = math.tanh %47 : vector<8x64xf32>
    %54 = vector.extract_strided_slice %52 {offsets = [0, 0], sizes = [8, 16], strides = [1, 1]} : vector<8x64xf32> to vector<8x16xf32>
    %55 = vector.extract_strided_slice %52 {offsets = [0, 16], sizes = [8, 16], strides = [1, 1]} : vector<8x64xf32> to vector<8x16xf32>
    %56 = vector.extract_strided_slice %53 {offsets = [0, 32], sizes = [8, 16], strides = [1, 1]} : vector<8x64xf32> to vector<8x16xf32>
    %57 = vector.extract_strided_slice %52 {offsets = [0, 48], sizes = [8, 16], strides = [1, 1]} : vector<8x64xf32> to vector<8x16xf32>
    %58 = arith.mulf %55, %42 : vector<8x16xf32>
    %59 = arith.mulf %54, %56 : vector<8x16xf32>
    %60 = arith.addf %58, %59 : vector<8x16xf32>
    %61 = math.tanh %60 : vector<8x16xf32>
    %62 = arith.mulf %57, %61 : vector<8x16xf32>
    %63 = vector.extract_strided_slice %6 {offsets = [24, 0], sizes = [8, 64], strides = [1, 1]} : vector<64x64xf32> to vector<8x64xf32>
    %cst_13 = arith.constant dense<0.000000e+00> : vector<8x64xf32>
    %64 = tpu.matmul %62, %1, %cst_13 {dimension_numbers = #tpu.dot_dimension_numbers<[1], [0], [0], [1], [0, 0, 1, 1], [], []>} : vector<8x16xf32>, vector<16x64xf32>, vector<8x64xf32> -> vector<8x64xf32>
    %65 = arith.addf %63, %64 : vector<8x64xf32>
    %66 = arith.negf %65 : vector<8x64xf32>
    %67 = math.exp %66 : vector<8x64xf32>
    %cst_14 = arith.constant 1.000000e+00 : f32
    %68 = vector.broadcast %cst_14 : f32 to vector<8x64xf32>
    %69 = arith.addf %68, %67 : vector<8x64xf32>
    %70 = arith.divf %68, %69 : vector<8x64xf32>
    %71 = math.tanh %65 : vector<8x64xf32>
    %72 = vector.extract_strided_slice %70 {offsets = [0, 0], sizes = [8, 16], strides = [1, 1]} : vector<8x64xf32> to vector<8x16xf32>
    %73 = vector.extract_strided_slice %70 {offsets = [0, 16], sizes = [8, 16], strides = [1, 1]} : vector<8x64xf32> to vector<8x16xf32>
    %74 = vector.extract_strided_slice %71 {offsets = [0, 32], sizes = [8, 16], strides = [1, 1]} : vector<8x64xf32> to vector<8x16xf32>
    %75 = vector.extract_strided_slice %70 {offsets = [0, 48], sizes = [8, 16], strides = [1, 1]} : vector<8x64xf32> to vector<8x16xf32>
    %76 = arith.mulf %73, %60 : vector<8x16xf32>
    %77 = arith.mulf %72, %74 : vector<8x16xf32>
    %78 = arith.addf %76, %77 : vector<8x16xf32>
    %79 = math.tanh %78 : vector<8x16xf32>
    %80 = arith.mulf %75, %79 : vector<8x16xf32>
    %81 = vector.extract_strided_slice %6 {offsets = [32, 0], sizes = [8, 64], strides = [1, 1]} : vector<64x64xf32> to vector<8x64xf32>
    %cst_15 = arith.constant dense<0.000000e+00> : vector<8x64xf32>
    %82 = tpu.matmul %80, %1, %cst_15 {dimension_numbers = #tpu.dot_dimension_numbers<[1], [0], [0], [1], [0, 0, 1, 1], [], []>} : vector<8x16xf32>, vector<16x64xf32>, vector<8x64xf32> -> vector<8x64xf32>
    %83 = arith.addf %81, %82 : vector<8x64xf32>
    %84 = arith.negf %83 : vector<8x64xf32>
    %85 = math.exp %84 : vector<8x64xf32>
    %cst_16 = arith.constant 1.000000e+00 : f32
    %86 = vector.broadcast %cst_16 : f32 to vector<8x64xf32>
    %87 = arith.addf %86, %85 : vector<8x64xf32>
    %88 = arith.divf %86, %87 : vector<8x64xf32>
    %89 = math.tanh %83 : vector<8x64xf32>
    %90 = vector.extract_strided_slice %88 {offsets = [0, 0], sizes = [8, 16], strides = [1, 1]} : vector<8x64xf32> to vector<8x16xf32>
    %91 = vector.extract_strided_slice %88 {offsets = [0, 16], sizes = [8, 16], strides = [1, 1]} : vector<8x64xf32> to vector<8x16xf32>
    %92 = vector.extract_strided_slice %89 {offsets = [0, 32], sizes = [8, 16], strides = [1, 1]} : vector<8x64xf32> to vector<8x16xf32>
    %93 = vector.extract_strided_slice %88 {offsets = [0, 48], sizes = [8, 16], strides = [1, 1]} : vector<8x64xf32> to vector<8x16xf32>
    %94 = arith.mulf %91, %78 : vector<8x16xf32>
    %95 = arith.mulf %90, %92 : vector<8x16xf32>
    %96 = arith.addf %94, %95 : vector<8x16xf32>
    %97 = math.tanh %96 : vector<8x16xf32>
    %98 = arith.mulf %93, %97 : vector<8x16xf32>
    %99 = vector.extract_strided_slice %6 {offsets = [40, 0], sizes = [8, 64], strides = [1, 1]} : vector<64x64xf32> to vector<8x64xf32>
    %cst_17 = arith.constant dense<0.000000e+00> : vector<8x64xf32>
    %100 = tpu.matmul %98, %1, %cst_17 {dimension_numbers = #tpu.dot_dimension_numbers<[1], [0], [0], [1], [0, 0, 1, 1], [], []>} : vector<8x16xf32>, vector<16x64xf32>, vector<8x64xf32> -> vector<8x64xf32>
    %101 = arith.addf %99, %100 : vector<8x64xf32>
    %102 = arith.negf %101 : vector<8x64xf32>
    %103 = math.exp %102 : vector<8x64xf32>
    %cst_18 = arith.constant 1.000000e+00 : f32
    %104 = vector.broadcast %cst_18 : f32 to vector<8x64xf32>
    %105 = arith.addf %104, %103 : vector<8x64xf32>
    %106 = arith.divf %104, %105 : vector<8x64xf32>
    %107 = math.tanh %101 : vector<8x64xf32>
    %108 = vector.extract_strided_slice %106 {offsets = [0, 0], sizes = [8, 16], strides = [1, 1]} : vector<8x64xf32> to vector<8x16xf32>
    %109 = vector.extract_strided_slice %106 {offsets = [0, 16], sizes = [8, 16], strides = [1, 1]} : vector<8x64xf32> to vector<8x16xf32>
    %110 = vector.extract_strided_slice %107 {offsets = [0, 32], sizes = [8, 16], strides = [1, 1]} : vector<8x64xf32> to vector<8x16xf32>
    %111 = vector.extract_strided_slice %106 {offsets = [0, 48], sizes = [8, 16], strides = [1, 1]} : vector<8x64xf32> to vector<8x16xf32>
    %112 = arith.mulf %109, %96 : vector<8x16xf32>
    %113 = arith.mulf %108, %110 : vector<8x16xf32>
    %114 = arith.addf %112, %113 : vector<8x16xf32>
    %115 = math.tanh %114 : vector<8x16xf32>
    %116 = arith.mulf %111, %115 : vector<8x16xf32>
    %117 = vector.extract_strided_slice %6 {offsets = [48, 0], sizes = [8, 64], strides = [1, 1]} : vector<64x64xf32> to vector<8x64xf32>
    %cst_19 = arith.constant dense<0.000000e+00> : vector<8x64xf32>
    %118 = tpu.matmul %116, %1, %cst_19 {dimension_numbers = #tpu.dot_dimension_numbers<[1], [0], [0], [1], [0, 0, 1, 1], [], []>} : vector<8x16xf32>, vector<16x64xf32>, vector<8x64xf32> -> vector<8x64xf32>
    %119 = arith.addf %117, %118 : vector<8x64xf32>
    %120 = arith.negf %119 : vector<8x64xf32>
    %121 = math.exp %120 : vector<8x64xf32>
    %cst_20 = arith.constant 1.000000e+00 : f32
    %122 = vector.broadcast %cst_20 : f32 to vector<8x64xf32>
    %123 = arith.addf %122, %121 : vector<8x64xf32>
    %124 = arith.divf %122, %123 : vector<8x64xf32>
    %125 = math.tanh %119 : vector<8x64xf32>
    %126 = vector.extract_strided_slice %124 {offsets = [0, 0], sizes = [8, 16], strides = [1, 1]} : vector<8x64xf32> to vector<8x16xf32>
    %127 = vector.extract_strided_slice %124 {offsets = [0, 16], sizes = [8, 16], strides = [1, 1]} : vector<8x64xf32> to vector<8x16xf32>
    %128 = vector.extract_strided_slice %125 {offsets = [0, 32], sizes = [8, 16], strides = [1, 1]} : vector<8x64xf32> to vector<8x16xf32>
    %129 = vector.extract_strided_slice %124 {offsets = [0, 48], sizes = [8, 16], strides = [1, 1]} : vector<8x64xf32> to vector<8x16xf32>
    %130 = arith.mulf %127, %114 : vector<8x16xf32>
    %131 = arith.mulf %126, %128 : vector<8x16xf32>
    %132 = arith.addf %130, %131 : vector<8x16xf32>
    %133 = math.tanh %132 : vector<8x16xf32>
    %134 = arith.mulf %129, %133 : vector<8x16xf32>
    %135 = vector.extract_strided_slice %6 {offsets = [56, 0], sizes = [8, 64], strides = [1, 1]} : vector<64x64xf32> to vector<8x64xf32>
    %cst_21 = arith.constant dense<0.000000e+00> : vector<8x64xf32>
    %136 = tpu.matmul %134, %1, %cst_21 {dimension_numbers = #tpu.dot_dimension_numbers<[1], [0], [0], [1], [0, 0, 1, 1], [], []>} : vector<8x16xf32>, vector<16x64xf32>, vector<8x64xf32> -> vector<8x64xf32>
    %137 = arith.addf %135, %136 : vector<8x64xf32>
    %138 = arith.negf %137 : vector<8x64xf32>
    %139 = math.exp %138 : vector<8x64xf32>
    %cst_22 = arith.constant 1.000000e+00 : f32
    %140 = vector.broadcast %cst_22 : f32 to vector<8x64xf32>
    %141 = arith.addf %140, %139 : vector<8x64xf32>
    %142 = arith.divf %140, %141 : vector<8x64xf32>
    %143 = math.tanh %137 : vector<8x64xf32>
    %144 = vector.extract_strided_slice %142 {offsets = [0, 0], sizes = [8, 16], strides = [1, 1]} : vector<8x64xf32> to vector<8x16xf32>
    %145 = vector.extract_strided_slice %142 {offsets = [0, 16], sizes = [8, 16], strides = [1, 1]} : vector<8x64xf32> to vector<8x16xf32>
    %146 = vector.extract_strided_slice %143 {offsets = [0, 32], sizes = [8, 16], strides = [1, 1]} : vector<8x64xf32> to vector<8x16xf32>
    %147 = vector.extract_strided_slice %142 {offsets = [0, 48], sizes = [8, 16], strides = [1, 1]} : vector<8x64xf32> to vector<8x16xf32>
    %148 = arith.mulf %145, %132 : vector<8x16xf32>
    %149 = arith.mulf %144, %146 : vector<8x16xf32>
    %150 = arith.addf %148, %149 : vector<8x16xf32>
    %151 = math.tanh %150 : vector<8x16xf32>
    %152 = arith.mulf %147, %151 : vector<8x16xf32>
    %153 = vector.extract_strided_slice %152 {offsets = [0, 0], sizes = [2, 16], strides = [1, 1]} : vector<8x16xf32> to vector<2x16xf32>
    %c0_23 = arith.constant 0 : index
    %c0_24 = arith.constant 0 : index
    %154 = vector.load %arg1[%c0_23, %c0_24] : memref<2x4xf32, #tpu.memory_space<vmem>>, vector<2x4xf32>
    %c32 = arith.constant 32 : index
    %c0_25 = arith.constant 0 : index
    %155 = vector.load %arg3[%c32, %c0_25] : memref<208x128xf32, #tpu.memory_space<vmem>>, vector<16x40xf32>
    %cst_26 = arith.constant dense<0.000000e+00> : vector<2x40xf32>
    %156 = tpu.matmul %153, %155, %cst_26 {dimension_numbers = #tpu.dot_dimension_numbers<[1], [0], [0], [1], [0, 0, 1, 1], [], []>} : vector<2x16xf32>, vector<16x40xf32>, vector<2x40xf32> -> vector<2x40xf32>
    %c48 = arith.constant 48 : index
    %c0_27 = arith.constant 0 : index
    %157 = vector.load %arg3[%c48, %c0_27] : memref<208x128xf32, #tpu.memory_space<vmem>>, vector<4x40xf32>
    %cst_28 = arith.constant dense<0.000000e+00> : vector<2x40xf32>
    %158 = tpu.matmul %154, %157, %cst_28 {dimension_numbers = #tpu.dot_dimension_numbers<[1], [0], [0], [1], [0, 0, 1, 1], [], []>} : vector<2x4xf32>, vector<4x40xf32>, vector<2x40xf32> -> vector<2x40xf32>
    %159 = arith.addf %156, %158 : vector<2x40xf32>
    %c56 = arith.constant 56 : index
    %c0_29 = arith.constant 0 : index
    %160 = vector.load %arg3[%c56, %c0_29] : memref<208x128xf32, #tpu.memory_space<vmem>>, vector<1x40xf32>
    %161 = vector.broadcast %160 : vector<1x40xf32> to vector<2x40xf32>
    %162 = arith.addf %159, %161 : vector<2x40xf32>
    %cst_30 = arith.constant 0.000000e+00 : f32
    %163 = vector.broadcast %cst_30 : f32 to vector<2x40xf32>
    %164 = arith.maximumf %162, %163 : vector<2x40xf32>
    %c64 = arith.constant 64 : index
    %c0_31 = arith.constant 0 : index
    %165 = vector.load %arg3[%c64, %c0_31] : memref<208x128xf32, #tpu.memory_space<vmem>>, vector<40x40xf32>
    %cst_32 = arith.constant dense<0.000000e+00> : vector<2x40xf32>
    %166 = tpu.matmul %164, %165, %cst_32 {dimension_numbers = #tpu.dot_dimension_numbers<[1], [0], [0], [1], [0, 0, 1, 1], [], []>} : vector<2x40xf32>, vector<40x40xf32>, vector<2x40xf32> -> vector<2x40xf32>
    %c104 = arith.constant 104 : index
    %c0_33 = arith.constant 0 : index
    %167 = vector.load %arg3[%c104, %c0_33] : memref<208x128xf32, #tpu.memory_space<vmem>>, vector<1x40xf32>
    %168 = vector.broadcast %167 : vector<1x40xf32> to vector<2x40xf32>
    %169 = arith.addf %166, %168 : vector<2x40xf32>
    %cst_34 = arith.constant 0.000000e+00 : f32
    %170 = vector.broadcast %cst_34 : f32 to vector<2x40xf32>
    %171 = arith.maximumf %169, %170 : vector<2x40xf32>
    %c112 = arith.constant 112 : index
    %c0_35 = arith.constant 0 : index
    %172 = vector.load %arg3[%c112, %c0_35] : memref<208x128xf32, #tpu.memory_space<vmem>>, vector<40x40xf32>
    %cst_36 = arith.constant dense<0.000000e+00> : vector<2x40xf32>
    %173 = tpu.matmul %171, %172, %cst_36 {dimension_numbers = #tpu.dot_dimension_numbers<[1], [0], [0], [1], [0, 0, 1, 1], [], []>} : vector<2x40xf32>, vector<40x40xf32>, vector<2x40xf32> -> vector<2x40xf32>
    %c152 = arith.constant 152 : index
    %c0_37 = arith.constant 0 : index
    %174 = vector.load %arg3[%c152, %c0_37] : memref<208x128xf32, #tpu.memory_space<vmem>>, vector<1x40xf32>
    %175 = vector.broadcast %174 : vector<1x40xf32> to vector<2x40xf32>
    %176 = arith.addf %173, %175 : vector<2x40xf32>
    %cst_38 = arith.constant 0.000000e+00 : f32
    %177 = vector.broadcast %cst_38 : f32 to vector<2x40xf32>
    %178 = arith.maximumf %176, %177 : vector<2x40xf32>
    %c160 = arith.constant 160 : index
    %c0_39 = arith.constant 0 : index
    %179 = vector.load %arg3[%c160, %c0_39] : memref<208x128xf32, #tpu.memory_space<vmem>>, vector<40x4xf32>
    %cst_40 = arith.constant dense<0.000000e+00> : vector<2x4xf32>
    %180 = tpu.matmul %178, %179, %cst_40 {dimension_numbers = #tpu.dot_dimension_numbers<[1], [0], [0], [1], [0, 0, 1, 1], [], []>} : vector<2x40xf32>, vector<40x4xf32>, vector<2x4xf32> -> vector<2x4xf32>
    %c200 = arith.constant 200 : index
    %c0_41 = arith.constant 0 : index
    %181 = vector.load %arg3[%c200, %c0_41] : memref<208x128xf32, #tpu.memory_space<vmem>>, vector<1x4xf32>
    %182 = vector.broadcast %181 : vector<1x4xf32> to vector<2x4xf32>
    %183 = arith.addf %180, %182 : vector<2x4xf32>
    %184 = vector.extract_strided_slice %183 {offsets = [0, 0], sizes = [2, 2], strides = [1, 1]} : vector<2x4xf32> to vector<2x2xf32>
    %185 = vector.extract_strided_slice %183 {offsets = [0, 2], sizes = [2, 2], strides = [1, 1]} : vector<2x4xf32> to vector<2x2xf32>
    %cst_42 = arith.constant -2.000000e+01 : f32
    %cst_43 = arith.constant 2.000000e+00 : f32
    %186 = vector.broadcast %cst_42 : f32 to vector<2x2xf32>
    %187 = arith.maximumf %186, %185 : vector<2x2xf32>
    %188 = vector.broadcast %cst_43 : f32 to vector<2x2xf32>
    %189 = arith.minimumf %188, %187 : vector<2x2xf32>
    %190 = math.exp %189 : vector<2x2xf32>
    %c0_44 = arith.constant 0 : index
    %c0_45 = arith.constant 0 : index
    %191 = vector.load %arg2[%c0_44, %c0_45] : memref<2x2xf32, #tpu.memory_space<vmem>>, vector<2x2xf32>
    %192 = arith.mulf %190, %191 : vector<2x2xf32>
    %193 = arith.addf %184, %192 : vector<2x2xf32>
    %194 = math.tanh %193 : vector<2x2xf32>
    %195 = vector.extract_strided_slice %193 {offsets = [0, 0], sizes = [1, 2], strides = [1, 1]} : vector<2x2xf32> to vector<1x2xf32>
    %196 = vector.broadcast %195 : vector<1x2xf32> to vector<2x2xf32>
    %197 = arith.subf %196, %184 : vector<2x2xf32>
    %198 = arith.mulf %197, %197 : vector<2x2xf32>
    %cst_46 = arith.constant 0.000000e+00 : f32
    %199 = vector.broadcast %cst_46 : f32 to vector<2x2xf32>
    %200 = arith.subf %199, %198 : vector<2x2xf32>
    %cst_47 = arith.constant 2.000000e+00 : f32
    %201 = vector.broadcast %cst_47 : f32 to vector<2x2xf32>
    %202 = arith.mulf %201, %190 : vector<2x2xf32>
    %203 = arith.mulf %202, %190 : vector<2x2xf32>
    %204 = arith.divf %200, %203 : vector<2x2xf32>
    %205 = arith.subf %204, %189 : vector<2x2xf32>
    %cst_48 = arith.constant 0.918938517 : f32
    %206 = vector.broadcast %cst_48 : f32 to vector<2x2xf32>
    %207 = arith.subf %205, %206 : vector<2x2xf32>
    %cst_49 = arith.constant 0.693147182 : f32
    %208 = vector.broadcast %cst_49 : f32 to vector<1x2xf32>
    %209 = arith.subf %208, %195 : vector<1x2xf32>
    %cst_50 = arith.constant -2.000000e+00 : f32
    %210 = vector.broadcast %cst_50 : f32 to vector<1x2xf32>
    %211 = arith.mulf %210, %195 : vector<1x2xf32>
    %cst_51 = arith.constant 0.000000e+00 : f32
    %212 = vector.broadcast %cst_51 : f32 to vector<1x2xf32>
    %213 = arith.maximumf %211, %212 : vector<1x2xf32>
    %214 = math.absf %211 : vector<1x2xf32>
    %cst_52 = arith.constant 0.000000e+00 : f32
    %215 = vector.broadcast %cst_52 : f32 to vector<1x2xf32>
    %216 = arith.subf %215, %214 : vector<1x2xf32>
    %217 = math.exp %216 : vector<1x2xf32>
    %cst_53 = arith.constant 1.000000e+00 : f32
    %218 = vector.broadcast %cst_53 : f32 to vector<1x2xf32>
    %219 = arith.addf %218, %217 : vector<1x2xf32>
    %220 = math.log %219 : vector<1x2xf32>
    %221 = arith.addf %213, %220 : vector<1x2xf32>
    %222 = arith.subf %209, %221 : vector<1x2xf32>
    %cst_54 = arith.constant 2.000000e+00 : f32
    %223 = vector.broadcast %cst_54 : f32 to vector<1x2xf32>
    %224 = arith.mulf %223, %222 : vector<1x2xf32>
    %225 = vector.broadcast %224 : vector<1x2xf32> to vector<2x2xf32>
    %226 = arith.subf %207, %225 : vector<2x2xf32>
    %c0_55 = arith.constant 0 : index
    %c0_56 = arith.constant 0 : index
    %227 = vector.load %arg4[%c0_55, %c0_56] : memref<2x8xf32, #tpu.memory_space<vmem>>, vector<2x2xf32>
    tpu.vector_store %arg4[%c0_55, %c0_56], %184 {strides = array<i32>} : memref<2x8xf32, #tpu.memory_space<vmem>>, vector<2x2xf32>,
    %c0_57 = arith.constant 0 : index
    %c2 = arith.constant 2 : index
    %228 = vector.load %arg4[%c0_57, %c2] : memref<2x8xf32, #tpu.memory_space<vmem>>, vector<2x2xf32>
    tpu.vector_store %arg4[%c0_57, %c2], %190 {strides = array<i32>} : memref<2x8xf32, #tpu.memory_space<vmem>>, vector<2x2xf32>,
    %c0_58 = arith.constant 0 : index
    %c4 = arith.constant 4 : index
    %229 = vector.load %arg4[%c0_58, %c4] : memref<2x8xf32, #tpu.memory_space<vmem>>, vector<2x2xf32>
    tpu.vector_store %arg4[%c0_58, %c4], %194 {strides = array<i32>} : memref<2x8xf32, #tpu.memory_space<vmem>>, vector<2x2xf32>,
    %c0_59 = arith.constant 0 : index
    %c6 = arith.constant 6 : index
    %230 = vector.load %arg4[%c0_59, %c6] : memref<2x8xf32, #tpu.memory_space<vmem>>, vector<2x2xf32>
    tpu.vector_store %arg4[%c0_59, %c6], %226 {strides = array<i32>} : memref<2x8xf32, #tpu.memory_space<vmem>>, vector<2x2xf32>,
    return
  }
}

</mosaic_0001>

<llo_original>
// kernel: forward.1
$region0: #{forward.1}
  #allocation0 [shape = 'u32[]', space=smem, size = 0x4, offset = 0x4, fixed_abs, tag = 'smem constant byte address 0x4 - core index']
  #allocation1 [shape = 'u32[144,128]{1,0:T(1,128)}', space=vmem, size = 0x12000, scoped, tag = 'internal scratch']
  %s0 = inlined_call_operand.vmem [shape: f32[64,8], index: 0, kind: input, shape index: {}]
  %s1 = inlined_call_operand.vmem [shape: f32[2,4], index: 1, kind: input, shape index: {}]
  %s2 = inlined_call_operand.vmem [shape: f32[2,2], index: 2, kind: input, shape index: {}]
  %s3 = inlined_call_operand.hbm [shape: f32[208,128], index: 3, kind: input, shape index: {}]
  %s4 = inlined_call_operand.vmem [shape: f32[2,8], index: 4, kind: output, shape index: {}]
  %s5 = sld [smem:[#allocation0]]
  $region30: #{forward.1} parent=0
    _
  %s7 = ssub.s32 1, %s5
  %s8 = scalar_select 0, %s7, %s5
  $region1: #{forward.1} parent=0
    #allocation2 [shape = 'u8[106496]{0}', space=vmem, size = 0x1a000, scoped, tag = 'input window, operand 3, single buffered']
    #allocation3 [shape = 's32[1]{0}', space=sflag, size = 0x4, scoped, tag = 'scoped memory for forward.1']
    %9 = vsyncpa [#allocation3], 0
    // Predicated region
    $region2: #{forward.1} parent=1 // pred_check
      _
    $region3: #{forward.1} parent=1 // pred_check_branch
      %11 = sbr.rel (0) target = $region5
    $region4: #{forward.1} parent=1 // pred_region
      _
    $region5: #{forward.1} parent=1 // pred_fallthru
      _
    // Predicated region
    $region6: #{forward.1} parent=1 // pred_check
      _
    $region7: #{forward.1} parent=1 // pred_check_branch
      %13 = sbr.rel (0) target = $region9
    $region8: #{forward.1} parent=1 // pred_region
      _
    $region9: #{forward.1} parent=1 // pred_fallthru
      _
    // Predicated region
    $region10: #{forward.1} parent=1 // pred_check
      _
    $region11: #{forward.1} parent=1 // pred_check_branch
      %15 = sbr.rel (0) target = $region13
    $region12: #{forward.1} parent=1 // pred_region
      _
    $region13: #{forward.1} parent=1 // pred_fallthru
      _
    // Predicated region
    $region14: #{forward.1} parent=1 // pred_check
      _
    $region15: #{forward.1} parent=1 // pred_check_branch
      %17 = sbr.rel (0) target = $region17
    $region16: #{forward.1} parent=1 // pred_region
      %s19 = ssub.s32 3328, 3328
      %20 = vsyncadd [#allocation3], %s19
      %s21 = sshll.u32 [#allocation2], 4
      %s22 = int_to_ptr.vmem [resolvable:$true] %s21
      %27 = dma.hbm_to_vmem [thread:$0]  %s3, 3328, %s22, [#allocation3], 128, 128, 8
    $region17: #{forward.1} parent=1 // pred_fallthru
      _
    // Predicated region
    $region18: #{forward.1} parent=1 // pred_check
      _
    $region19: #{forward.1} parent=1 // pred_check_branch
      %29 = sbr.rel (0) target = $region21
    $region20: #{forward.1} parent=1 // pred_region
      %30 = dma.done [#allocation3], 3328
    $region21: #{forward.1} parent=1 // pred_fallthru
      _
    %v31 = vld [vmem:[#allocation2] sm:$0xff]
    %v32 = vld [vmem:[#allocation2 + $0x8] sm:$0xff]
    %v33 = vld [vmem:[#allocation2 + $0x10] sm:$0xff]
    %v34 = vld [vmem:[#allocation2 + $0x18] sm:$0x1]
    %v35 = vld [vmem:[%s0] sm:$0xff]
    %v36 = vld [vmem:[%s0 + $0x8] sm:$0xff]
    %v37 = vld [vmem:[%s0 + $0x10] sm:$0xff]
    %v38 = vld [vmem:[%s0 + $0x18] sm:$0xff]
    %v39 = vld [vmem:[%s0 + $0x20] sm:$0xff]
    %v40 = vld [vmem:[%s0 + $0x28] sm:$0xff]
    %v41 = vld [vmem:[%s0 + $0x30] sm:$0xff]
    %v42 = vld [vmem:[%s0 + $0x38] sm:$0xff]
    %v43 = vlaneseq
    %v44 = vshrl.u32 %v43, 7
    %v45 = vsub.s32 0, %v44
    %v46 = vrot.slane %v34, %v45
    %vm47 = vcmask 64512
    %v49 = vsel %vm47, %v35, 0
    %v52 = vsel %vm47, %v36, 0
    %v55 = vsel %vm47, %v37, 0
    %v58 = vsel %vm47, %v38, 0
    %v61 = vsel %vm47, %v39, 0
    %v64 = vsel %vm47, %v40, 0
    %v67 = vsel %vm47, %v41, 0
    %v70 = vsel %vm47, %v42, 0
    %72 = vmatprep.subr.mxu0 0.0
    %73 = vmatpush1.msra.mxu0 0.0
    %74 = vmatprep.subr.mxu0 0.0
    %75 = vmatpush1.msra.mxu0 0.0
    %76 = vmatprep.subr.mxu0 0.0
    %77 = vmatpush1.msra.mxu0 0.0
    %78 = vmatprep.subr.mxu0 0.0
    %79 = vmatpush1.msra.mxu0 0.0
    %80 = vmatprep.subr.mxu0 0.0
    %81 = vmatpush1.msra.mxu0 0.0
    %82 = vmatprep.subr.mxu0 0.0
    %83 = vmatpush1.msra.mxu0 0.0
    %84 = vmatprep.subr.mxu0 0.0
    %85 = vmatpush1.msra.mxu0 0.0
    %86 = vmatprep.subr.mxu0 0.0
    %87 = vmatpush1.msra.mxu0 0.0
    %88 = vmatprep.subr.mxu0 0.0
    %89 = vmatpush1.msra.mxu0 0.0
    %90 = vmatprep.subr.mxu0 0.0
    %91 = vmatpush1.msra.mxu0 0.0
    %92 = vmatprep.subr.mxu0 0.0
    %93 = vmatpush1.msra.mxu0 0.0
    %94 = vmatprep.subr.mxu0 0.0
    %95 = vmatpush1.msra.mxu0 0.0
    %96 = vmatprep.subr.mxu0 0.0
    %97 = vmatpush1.msra.mxu0 0.0
    %98 = vmatprep.subr.mxu0 0.0
    %99 = vmatpush1.msra.mxu0 0.0
    %100 = vmatprep.subr.mxu0 0.0
    %101 = vmatpush1.msra.mxu0 0.0
    %102 = vmatprep.subr.mxu0 0.0
    %103 = vmatpush1.msra.mxu0 %v31
    %104 = vmatprep.subr.mxu0 0.0
    %105 = vmatpush2.msra.mxu0 0.0
    %106 = vmatprep.subr.mxu0 0.0
    %107 = vmatpush2.msra.mxu0 0.0
    %108 = vmatprep.subr.mxu0 0.0
    %109 = vmatpush2.msra.mxu0 0.0
    %110 = vmatprep.subr.mxu0 0.0
    %111 = vmatpush2.msra.mxu0 0.0
    %112 = vmatprep.subr.mxu0 0.0
    %113 = vmatpush2.msra.mxu0 0.0
    %114 = vmatprep.subr.mxu0 0.0
    %115 = vmatpush2.msra.mxu0 0.0
    %116 = vmatprep.subr.mxu0 0.0
    %117 = vmatpush2.msra.mxu0 0.0
    %118 = vmatprep.subr.mxu0 0.0
    %119 = vmatpush2.msra.mxu0 0.0
    %120 = vmatprep.subr.mxu0 0.0
    %121 = vmatpush2.msra.mxu0 0.0
    %122 = vmatprep.subr.mxu0 0.0
    %123 = vmatpush2.msra.mxu0 0.0
    %124 = vmatprep.subr.mxu0 0.0
    %125 = vmatpush2.msra.mxu0 0.0
    %126 = vmatprep.subr.mxu0 0.0
    %127 = vmatpush2.msra.mxu0 0.0
    %128 = vmatprep.subr.mxu0 0.0
    %129 = vmatpush2.msra.mxu0 0.0
    %130 = vmatprep.subr.mxu0 0.0
    %131 = vmatpush2.msra.mxu0 0.0
    %132 = vmatprep.subr.mxu0 0.0
    %133 = vmatpush2.msra.mxu0 0.0
    %134 = vmatprep.subr.mxu0 0.0
    %135 = vmatpush2.msra.mxu0 0.0
    %136 = vmatprep.mubr.f32.mxu0 0.0
    %137 = vmatmul.mubr.f32.gmra.mxu0 %v49
    %v138 = vpop.f32.mrf.mxu0
    %v139 = vadd.f32 %v46, %v138
    %v140 = vpop.f32.mrf.mxu0
    %141 = vmatprep.mubr.f32.mxu0 0.0
    %142 = vmatmul.mubr.f32.gmra.mxu0 %v52
    %v143 = vpop.f32.mrf.mxu0
    %v144 = vadd.f32 %v46, %v143
    %v145 = vpop.f32.mrf.mxu0
    %146 = vmatprep.mubr.f32.mxu0 0.0
    %147 = vmatmul.mubr.f32.gmra.mxu0 %v55
    %v148 = vpop.f32.mrf.mxu0
    %v149 = vadd.f32 %v46, %v148
    %v150 = vpop.f32.mrf.mxu0
    %151 = vmatprep.mubr.f32.mxu0 0.0
    %152 = vmatmul.mubr.f32.gmra.mxu0 %v58
    %v153 = vpop.f32.mrf.mxu0
    %v154 = vadd.f32 %v46, %v153
    %v155 = vpop.f32.mrf.mxu0
    %156 = vmatprep.mubr.f32.mxu0 0.0
    %157 = vmatmul.mubr.f32.gmra.mxu0 %v61
    %v158 = vpop.f32.mrf.mxu0
    %v159 = vadd.f32 %v46, %v158
    %v160 = vpop.f32.mrf.mxu0
    %161 = vmatprep.mubr.f32.mxu0 0.0
    %162 = vmatmul.mubr.f32.gmra.mxu0 %v64
    %v163 = vpop.f32.mrf.mxu0
    %v164 = vadd.f32 %v46, %v163
    %v165 = vpop.f32.mrf.mxu0
    %166 = vmatprep.mubr.f32.mxu0 0.0
    %167 = vmatmul.mubr.f32.gmra.mxu0 %v67
    %v168 = vpop.f32.mrf.mxu0
    %v169 = vadd.f32 %v46, %v168
    %v170 = vpop.f32.mrf.mxu0
    %171 = vmatprep.mubr.f32.mxu0 0.0
    %172 = vmatmul.mubr.f32.gmra.mxu0 %v70
    %v173 = vpop.f32.mrf.mxu0
    %v174 = vadd.f32 %v46, %v173
    %v175 = vpop.f32.mrf.mxu0
    %176 = vdwg.mxu0
    %vm177 = vcmask 130048
    %v179 = vsel %vm177, 0.0, 0
    %181 = vmatprep.subr.mxu0 0.0
    %182 = vmatpush1.msra.mxu0 0.0
    %183 = vmatprep.subr.mxu0 0.0
    %184 = vmatpush1.msra.mxu0 0.0
    %185 = vmatprep.subr.mxu0 0.0
    %186 = vmatpush1.msra.mxu0 0.0
    %187 = vmatprep.subr.mxu0 0.0
    %188 = vmatpush1.msra.mxu0 0.0
    %189 = vmatprep.subr.mxu0 0.0
    %190 = vmatpush1.msra.mxu0 0.0
    %191 = vmatprep.subr.mxu0 0.0
    %192 = vmatpush1.msra.mxu0 0.0
    %193 = vmatprep.subr.mxu0 0.0
    %194 = vmatpush1.msra.mxu0 0.0
    %195 = vmatprep.subr.mxu0 0.0
    %196 = vmatpush1.msra.mxu0 0.0
    %197 = vmatprep.subr.mxu0 0.0
    %198 = vmatpush1.msra.mxu0 0.0
    %199 = vmatprep.subr.mxu0 0.0
    %200 = vmatpush1.msra.mxu0 0.0
    %201 = vmatprep.subr.mxu0 0.0
    %202 = vmatpush1.msra.mxu0 0.0
    %203 = vmatprep.subr.mxu0 0.0
    %204 = vmatpush1.msra.mxu0 0.0
    %205 = vmatprep.subr.mxu0 0.0
    %206 = vmatpush1.msra.mxu0 0.0
    %207 = vmatprep.subr.mxu0 0.0
    %208 = vmatpush1.msra.mxu0 0.0
    %209 = vmatprep.subr.mxu0 0.0
    %210 = vmatpush1.msra.mxu0 %v33
    %211 = vmatprep.subr.mxu0 0.0
    %212 = vmatpush1.msra.mxu0 %v32
    %213 = vmatprep.subr.mxu0 0.0
    %214 = vmatpush2.msra.mxu0 0.0
    %215 = vmatprep.subr.mxu0 0.0
    %216 = vmatpush2.msra.mxu0 0.0
    %217 = vmatprep.subr.mxu0 0.0
    %218 = vmatpush2.msra.mxu0 0.0
    %219 = vmatprep.subr.mxu0 0.0
    %220 = vmatpush2.msra.mxu0 0.0
    %221 = vmatprep.subr.mxu0 0.0
    %222 = vmatpush2.msra.mxu0 0.0
    %223 = vmatprep.subr.mxu0 0.0
    %224 = vmatpush2.msra.mxu0 0.0
    %225 = vmatprep.subr.mxu0 0.0
    %226 = vmatpush2.msra.mxu0 0.0
    %227 = vmatprep.subr.mxu0 0.0
    %228 = vmatpush2.msra.mxu0 0.0
    %229 = vmatprep.subr.mxu0 0.0
    %230 = vmatpush2.msra.mxu0 0.0
    %231 = vmatprep.subr.mxu0 0.0
    %232 = vmatpush2.msra.mxu0 0.0
    %233 = vmatprep.subr.mxu0 0.0
    %234 = vmatpush2.msra.mxu0 0.0
    %235 = vmatprep.subr.mxu0 0.0
    %236 = vmatpush2.msra.mxu0 0.0
    %237 = vmatprep.subr.mxu0 0.0
    %238 = vmatpush2.msra.mxu0 0.0
    %239 = vmatprep.subr.mxu0 0.0
    %240 = vmatpush2.msra.mxu0 0.0
    %241 = vmatprep.subr.mxu0 0.0
    %242 = vmatpush2.msra.mxu0 0.0
    %243 = vmatprep.subr.mxu0 0.0
    %244 = vmatpush2.msra.mxu0 0.0
    %245 = vmatprep.mubr.f32.mxu0 0.0
    %246 = vmatmul.mubr.f32.gmra.mxu0 %v179
    %v247 = vpop.f32.mrf.mxu0
    %v248 = vadd.f32 0.0, %v247
    %v249 = vpop.f32.mrf.mxu0
    %250 = vdwg.mxu0
    %v251 = vadd.f32 %v139, %v248
    %v252 = vxor.u32 %v251, 2147483648
    %v253 = vmul.f32 %v252, 1.442695
    %v254 = vpow.pop %v253
    %v255 = vadd.f32 %v254, 1.0
    %v256 = vrcp.pop %v255
    %v257 = vmul.f32 1.0, %v256
    %v258 = vtanh.pop %v251
    %v259 = vmul.f32 %v257, 0.0
    %261 = vrot.lane.b32.xlu0 %v258, 96
    %v262 = vpop.permute.xlu0 %261
    %v264 = vmul.f32 %v257, %v262
    %266 = vrot.lane.b32.xlu0 %v264, 16
    %v267 = vpop.permute.xlu0 %266
    %v269 = vadd.f32 %v259, %v267
    %v270 = vtanh.pop %v269
    %272 = vrot.lane.b32.xlu0 %v270, 32
    %v273 = vpop.permute.xlu0 %272
    %v275 = vmul.f32 %v257, %v273
    %277 = vrot.lane.b32.xlu0 %v275, 80
    %v278 = vpop.permute.xlu0 %277
    %v279 = vsel %vm177, %v278, 0
    %281 = vmatprep.subr.mxu0 0.0
    %282 = vmatpush1.msra.mxu0 0.0
    %283 = vmatprep.subr.mxu0 0.0
    %284 = vmatpush1.msra.mxu0 0.0
    %285 = vmatprep.subr.mxu0 0.0
    %286 = vmatpush1.msra.mxu0 0.0
    %287 = vmatprep.subr.mxu0 0.0
    %288 = vmatpush1.msra.mxu0 0.0
    %289 = vmatprep.subr.mxu0 0.0
    %290 = vmatpush1.msra.mxu0 0.0
    %291 = vmatprep.subr.mxu0 0.0
    %292 = vmatpush1.msra.mxu0 0.0
    %293 = vmatprep.subr.mxu0 0.0
    %294 = vmatpush1.msra.mxu0 0.0
    %295 = vmatprep.subr.mxu0 0.0
    %296 = vmatpush1.msra.mxu0 0.0
    %297 = vmatprep.subr.mxu0 0.0
    %298 = vmatpush1.msra.mxu0 0.0
    %299 = vmatprep.subr.mxu0 0.0
    %300 = vmatpush1.msra.mxu0 0.0
    %301 = vmatprep.subr.mxu0 0.0
    %302 = vmatpush1.msra.mxu0 0.0
    %303 = vmatprep.subr.mxu0 0.0
    %304 = vmatpush1.msra.mxu0 0.0
    %305 = vmatprep.subr.mxu0 0.0
    %306 = vmatpush1.msra.mxu0 0.0
    %307 = vmatprep.subr.mxu0 0.0
    %308 = vmatpush1.msra.mxu0 0.0
    %309 = vmatprep.subr.mxu0 0.0
    %310 = vmatpush1.msra.mxu0 %v33
    %311 = vmatprep.subr.mxu0 0.0
    %312 = vmatpush1.msra.mxu0 %v32
    %313 = vmatprep.subr.mxu0 0.0
    %314 = vmatpush2.msra.mxu0 0.0
    %315 = vmatprep.subr.mxu0 0.0
    %316 = vmatpush2.msra.mxu0 0.0
    %317 = vmatprep.subr.mxu0 0.0
    %318 = vmatpush2.msra.mxu0 0.0
    %319 = vmatprep.subr.mxu0 0.0
    %320 = vmatpush2.msra.mxu0 0.0
    %321 = vmatprep.subr.mxu0 0.0
    %322 = vmatpush2.msra.mxu0 0.0
    %323 = vmatprep.subr.mxu0 0.0
    %324 = vmatpush2.msra.mxu0 0.0
    %325 = vmatprep.subr.mxu0 0.0
    %326 = vmatpush2.msra.mxu0 0.0
    %327 = vmatprep.subr.mxu0 0.0
    %328 = vmatpush2.msra.mxu0 0.0
    %329 = vmatprep.subr.mxu0 0.0
    %330 = vmatpush2.msra.mxu0 0.0
    %331 = vmatprep.subr.mxu0 0.0
    %332 = vmatpush2.msra.mxu0 0.0
    %333 = vmatprep.subr.mxu0 0.0
    %334 = vmatpush2.msra.mxu0 0.0
    %335 = vmatprep.subr.mxu0 0.0
    %336 = vmatpush2.msra.mxu0 0.0
    %337 = vmatprep.subr.mxu0 0.0
    %338 = vmatpush2.msra.mxu0 0.0
    %339 = vmatprep.subr.mxu0 0.0
    %340 = vmatpush2.msra.mxu0 0.0
    %341 = vmatprep.subr.mxu0 0.0
    %342 = vmatpush2.msra.mxu0 0.0
    %343 = vmatprep.subr.mxu0 0.0
    %344 = vmatpush2.msra.mxu0 0.0
    %345 = vmatprep.mubr.f32.mxu0 0.0
    %346 = vmatmul.mubr.f32.gmra.mxu0 %v279
    %v347 = vpop.f32.mrf.mxu0
    %v348 = vadd.f32 0.0, %v347
    %v349 = vpop.f32.mrf.mxu0
    %350 = vdwg.mxu0
    %v351 = vadd.f32 %v144, %v348
    %v352 = vxor.u32 %v351, 2147483648
    %v353 = vmul.f32 %v352, 1.442695
    %v354 = vpow.pop %v353
    %v355 = vadd.f32 %v354, 1.0
    %v356 = vrcp.pop %v355
    %v357 = vmul.f32 1.0, %v356
    %v358 = vtanh.pop %v351
    %v359 = vmul.f32 %v357, %v269
    %361 = vrot.lane.b32.xlu0 %v358, 96
    %v362 = vpop.permute.xlu0 %361
    %v364 = vmul.f32 %v357, %v362
    %366 = vrot.lane.b32.xlu0 %v364, 16
    %v367 = vpop.permute.xlu0 %366
    %v369 = vadd.f32 %v359, %v367
    %v370 = vtanh.pop %v369
    %372 = vrot.lane.b32.xlu0 %v370, 32
    %v373 = vpop.permute.xlu0 %372
    %v375 = vmul.f32 %v357, %v373
    %377 = vrot.lane.b32.xlu0 %v375, 80
    %v378 = vpop.permute.xlu0 %377
    %v379 = vsel %vm177, %v378, 0
    %381 = vmatprep.subr.mxu0 0.0
    %382 = vmatpush1.msra.mxu0 0.0
    %383 = vmatprep.subr.mxu0 0.0
    %384 = vmatpush1.msra.mxu0 0.0
    %385 = vmatprep.subr.mxu0 0.0
    %386 = vmatpush1.msra.mxu0 0.0
    %387 = vmatprep.subr.mxu0 0.0
    %388 = vmatpush1.msra.mxu0 0.0
    %389 = vmatprep.subr.mxu0 0.0
    %390 = vmatpush1.msra.mxu0 0.0
    %391 = vmatprep.subr.mxu0 0.0
    %392 = vmatpush1.msra.mxu0 0.0
    %393 = vmatprep.subr.mxu0 0.0
    %394 = vmatpush1.msra.mxu0 0.0
    %395 = vmatprep.subr.mxu0 0.0
    %396 = vmatpush1.msra.mxu0 0.0
    %397 = vmatprep.subr.mxu0 0.0
    %398 = vmatpush1.msra.mxu0 0.0
    %399 = vmatprep.subr.mxu0 0.0
    %400 = vmatpush1.msra.mxu0 0.0
    %401 = vmatprep.subr.mxu0 0.0
    %402 = vmatpush1.msra.mxu0 0.0
    %403 = vmatprep.subr.mxu0 0.0
    %404 = vmatpush1.msra.mxu0 0.0
    %405 = vmatprep.subr.mxu0 0.0
    %406 = vmatpush1.msra.mxu0 0.0
    %407 = vmatprep.subr.mxu0 0.0
    %408 = vmatpush1.msra.mxu0 0.0
    %409 = vmatprep.subr.mxu0 0.0
    %410 = vmatpush1.msra.mxu0 %v33
    %411 = vmatprep.subr.mxu0 0.0
    %412 = vmatpush1.msra.mxu0 %v32
    %413 = vmatprep.subr.mxu0 0.0
    %414 = vmatpush2.msra.mxu0 0.0
    %415 = vmatprep.subr.mxu0 0.0
    %416 = vmatpush2.msra.mxu0 0.0
    %417 = vmatprep.subr.mxu0 0.0
    %418 = vmatpush2.msra.mxu0 0.0
    %419 = vmatprep.subr.mxu0 0.0
    %420 = vmatpush2.msra.mxu0 0.0
    %421 = vmatprep.subr.mxu0 0.0
    %422 = vmatpush2.msra.mxu0 0.0
    %423 = vmatprep.subr.mxu0 0.0
    %424 = vmatpush2.msra.mxu0 0.0
    %425 = vmatprep.subr.mxu0 0.0
    %426 = vmatpush2.msra.mxu0 0.0
    %427 = vmatprep.subr.mxu0 0.0
    %428 = vmatpush2.msra.mxu0 0.0
    %429 = vmatprep.subr.mxu0 0.0
    %430 = vmatpush2.msra.mxu0 0.0
    %431 = vmatprep.subr.mxu0 0.0
    %432 = vmatpush2.msra.mxu0 0.0
    %433 = vmatprep.subr.mxu0 0.0
    %434 = vmatpush2.msra.mxu0 0.0
    %435 = vmatprep.subr.mxu0 0.0
    %436 = vmatpush2.msra.mxu0 0.0
    %437 = vmatprep.subr.mxu0 0.0
    %438 = vmatpush2.msra.mxu0 0.0
    %439 = vmatprep.subr.mxu0 0.0
    %440 = vmatpush2.msra.mxu0 0.0
    %441 = vmatprep.subr.mxu0 0.0
    %442 = vmatpush2.msra.mxu0 0.0
    %443 = vmatprep.subr.mxu0 0.0
    %444 = vmatpush2.msra.mxu0 0.0
    %445 = vmatprep.mubr.f32.mxu0 0.0
    %446 = vmatmul.mubr.f32.gmra.mxu0 %v379
    %v447 = vpop.f32.mrf.mxu0
    %v448 = vadd.f32 0.0, %v447
    %v449 = vpop.f32.mrf.mxu0
    %450 = vdwg.mxu0
    %v451 = vadd.f32 %v149, %v448
    %v452 = vxor.u32 %v451, 2147483648
    %v453 = vmul.f32 %v452, 1.442695
    %v454 = vpow.pop %v453
    %v455 = vadd.f32 %v454, 1.0
    %v456 = vrcp.pop %v455
    %v457 = vmul.f32 1.0, %v456
    %v458 = vtanh.pop %v451
    %v459 = vmul.f32 %v457, %v369
    %461 = vrot.lane.b32.xlu0 %v458, 96
    %v462 = vpop.permute.xlu0 %461
    %v464 = vmul.f32 %v457, %v462
    %466 = vrot.lane.b32.xlu0 %v464, 16
    %v467 = vpop.permute.xlu0 %466
    %v469 = vadd.f32 %v459, %v467
    %v470 = vtanh.pop %v469
    %472 = vrot.lane.b32.xlu0 %v470, 32
    %v473 = vpop.permute.xlu0 %472
    %v475 = vmul.f32 %v457, %v473
    %477 = vrot.lane.b32.xlu0 %v475, 80
    %v478 = vpop.permute.xlu0 %477
    %v479 = vsel %vm177, %v478, 0
    %481 = vmatprep.subr.mxu0 0.0
    %482 = vmatpush1.msra.mxu0 0.0
    %483 = vmatprep.subr.mxu0 0.0
    %484 = vmatpush1.msra.mxu0 0.0
    %485 = vmatprep.subr.mxu0 0.0
    %486 = vmatpush1.msra.mxu0 0.0
    %487 = vmatprep.subr.mxu0 0.0
    %488 = vmatpush1.msra.mxu0 0.0
    %489 = vmatprep.subr.mxu0 0.0
    %490 = vmatpush1.msra.mxu0 0.0
    %491 = vmatprep.subr.mxu0 0.0
    %492 = vmatpush1.msra.mxu0 0.0
    %493 = vmatprep.subr.mxu0 0.0
    %494 = vmatpush1.msra.mxu0 0.0
    %495 = vmatprep.subr.mxu0 0.0
    %496 = vmatpush1.msra.mxu0 0.0
    %497 = vmatprep.subr.mxu0 0.0
    %498 = vmatpush1.msra.mxu0 0.0
    %499 = vmatprep.subr.mxu0 0.0
    %500 = vmatpush1.msra.mxu0 0.0
    %501 = vmatprep.subr.mxu0 0.0
    %502 = vmatpush1.msra.mxu0 0.0
    %503 = vmatprep.subr.mxu0 0.0
    %504 = vmatpush1.msra.mxu0 0.0
    %505 = vmatprep.subr.mxu0 0.0
    %506 = vmatpush1.msra.mxu0 0.0
    %507 = vmatprep.subr.mxu0 0.0
    %508 = vmatpush1.msra.mxu0 0.0
    %509 = vmatprep.subr.mxu0 0.0
    %510 = vmatpush1.msra.mxu0 %v33
    %511 = vmatprep.subr.mxu0 0.0
    %512 = vmatpush1.msra.mxu0 %v32
    %513 = vmatprep.subr.mxu0 0.0
    %514 = vmatpush2.msra.mxu0 0.0
    %515 = vmatprep.subr.mxu0 0.0
    %516 = vmatpush2.msra.mxu0 0.0
    %517 = vmatprep.subr.mxu0 0.0
    %518 = vmatpush2.msra.mxu0 0.0
    %519 = vmatprep.subr.mxu0 0.0
    %520 = vmatpush2.msra.mxu0 0.0
    %521 = vmatprep.subr.mxu0 0.0
    %522 = vmatpush2.msra.mxu0 0.0
    %523 = vmatprep.subr.mxu0 0.0
    %524 = vmatpush2.msra.mxu0 0.0
    %525 = vmatprep.subr.mxu0 0.0
    %526 = vmatpush2.msra.mxu0 0.0
    %527 = vmatprep.subr.mxu0 0.0
    %528 = vmatpush2.msra.mxu0 0.0
    %529 = vmatprep.subr.mxu0 0.0
    %530 = vmatpush2.msra.mxu0 0.0
    %531 = vmatprep.subr.mxu0 0.0
    %532 = vmatpush2.msra.mxu0 0.0
    %533 = vmatprep.subr.mxu0 0.0
    %534 = vmatpush2.msra.mxu0 0.0
    %535 = vmatprep.subr.mxu0 0.0
    %536 = vmatpush2.msra.mxu0 0.0
    %537 = vmatprep.subr.mxu0 0.0
    %538 = vmatpush2.msra.mxu0 0.0
    %539 = vmatprep.subr.mxu0 0.0
    %540 = vmatpush2.msra.mxu0 0.0
    %541 = vmatprep.subr.mxu0 0.0
    %542 = vmatpush2.msra.mxu0 0.0
    %543 = vmatprep.subr.mxu0 0.0
    %544 = vmatpush2.msra.mxu0 0.0
    %545 = vmatprep.mubr.f32.mxu0 0.0
    %546 = vmatmul.mubr.f32.gmra.mxu0 %v479
    %v547 = vpop.f32.mrf.mxu0
    %v548 = vadd.f32 0.0, %v547
    %v549 = vpop.f32.mrf.mxu0
    %550 = vdwg.mxu0
    %v551 = vadd.f32 %v154, %v548
    %v552 = vxor.u32 %v551, 2147483648
    %v553 = vmul.f32 %v552, 1.442695
    %v554 = vpow.pop %v553
    %v555 = vadd.f32 %v554, 1.0
    %v556 = vrcp.pop %v555
    %v557 = vmul.f32 1.0, %v556
    %v558 = vtanh.pop %v551
    %v559 = vmul.f32 %v557, %v469
    %561 = vrot.lane.b32.xlu0 %v558, 96
    %v562 = vpop.permute.xlu0 %561
    %v564 = vmul.f32 %v557, %v562
    %566 = vrot.lane.b32.xlu0 %v564, 16
    %v567 = vpop.permute.xlu0 %566
    %v569 = vadd.f32 %v559, %v567
    %v570 = vtanh.pop %v569
    %572 = vrot.lane.b32.xlu0 %v570, 32
    %v573 = vpop.permute.xlu0 %572
    %v575 = vmul.f32 %v557, %v573
    %577 = vrot.lane.b32.xlu0 %v575, 80
    %v578 = vpop.permute.xlu0 %577
    %v579 = vsel %vm177, %v578, 0
    %581 = vmatprep.subr.mxu0 0.0
    %582 = vmatpush1.msra.mxu0 0.0
    %583 = vmatprep.subr.mxu0 0.0
    %584 = vmatpush1.msra.mxu0 0.0
    %585 = vmatprep.subr.mxu0 0.0
    %586 = vmatpush1.msra.mxu0 0.0
    %587 = vmatprep.subr.mxu0 0.0
    %588 = vmatpush1.msra.mxu0 0.0
    %589 = vmatprep.subr.mxu0 0.0
    %590 = vmatpush1.msra.mxu0 0.0
    %591 = vmatprep.subr.mxu0 0.0
    %592 = vmatpush1.msra.mxu0 0.0
    %593 = vmatprep.subr.mxu0 0.0
    %594 = vmatpush1.msra.mxu0 0.0
    %595 = vmatprep.subr.mxu0 0.0
    %596 = vmatpush1.msra.mxu0 0.0
    %597 = vmatprep.subr.mxu0 0.0
    %598 = vmatpush1.msra.mxu0 0.0
    %599 = vmatprep.subr.mxu0 0.0
    %600 = vmatpush1.msra.mxu0 0.0
    %601 = vmatprep.subr.mxu0 0.0
    %602 = vmatpush1.msra.mxu0 0.0
    %603 = vmatprep.subr.mxu0 0.0
    %604 = vmatpush1.msra.mxu0 0.0
    %605 = vmatprep.subr.mxu0 0.0
    %606 = vmatpush1.msra.mxu0 0.0
    %607 = vmatprep.subr.mxu0 0.0
    %608 = vmatpush1.msra.mxu0 0.0
    %609 = vmatprep.subr.mxu0 0.0
    %610 = vmatpush1.msra.mxu0 %v33
    %611 = vmatprep.subr.mxu0 0.0
    %612 = vmatpush1.msra.mxu0 %v32
    %613 = vmatprep.subr.mxu0 0.0
    %614 = vmatpush2.msra.mxu0 0.0
    %615 = vmatprep.subr.mxu0 0.0
    %616 = vmatpush2.msra.mxu0 0.0
    %617 = vmatprep.subr.mxu0 0.0
    %618 = vmatpush2.msra.mxu0 0.0
    %619 = vmatprep.subr.mxu0 0.0
    %620 = vmatpush2.msra.mxu0 0.0
    %621 = vmatprep.subr.mxu0 0.0
    %622 = vmatpush2.msra.mxu0 0.0
    %623 = vmatprep.subr.mxu0 0.0
    %624 = vmatpush2.msra.mxu0 0.0
    %625 = vmatprep.subr.mxu0 0.0
    %626 = vmatpush2.msra.mxu0 0.0
    %627 = vmatprep.subr.mxu0 0.0
    %628 = vmatpush2.msra.mxu0 0.0
    %629 = vmatprep.subr.mxu0 0.0
    %630 = vmatpush2.msra.mxu0 0.0
    %631 = vmatprep.subr.mxu0 0.0
    %632 = vmatpush2.msra.mxu0 0.0
    %633 = vmatprep.subr.mxu0 0.0
    %634 = vmatpush2.msra.mxu0 0.0
    %635 = vmatprep.subr.mxu0 0.0
    %636 = vmatpush2.msra.mxu0 0.0
    %637 = vmatprep.subr.mxu0 0.0
    %638 = vmatpush2.msra.mxu0 0.0
    %639 = vmatprep.subr.mxu0 0.0
    %640 = vmatpush2.msra.mxu0 0.0
    %641 = vmatprep.subr.mxu0 0.0
    %642 = vmatpush2.msra.mxu0 0.0
    %643 = vmatprep.subr.mxu0 0.0
    %644 = vmatpush2.msra.mxu0 0.0
    %645 = vmatprep.mubr.f32.mxu0 0.0
    %646 = vmatmul.mubr.f32.gmra.mxu0 %v579
    %v647 = vpop.f32.mrf.mxu0
    %v648 = vadd.f32 0.0, %v647
    %v649 = vpop.f32.mrf.mxu0
    %650 = vdwg.mxu0
    %v651 = vadd.f32 %v159, %v648
    %v652 = vxor.u32 %v651, 2147483648
    %v653 = vmul.f32 %v652, 1.442695
    %v654 = vpow.pop %v653
    %v655 = vadd.f32 %v654, 1.0
    %v656 = vrcp.pop %v655
    %v657 = vmul.f32 1.0, %v656
    %v658 = vtanh.pop %v651
    %v659 = vmul.f32 %v657, %v569
    %661 = vrot.lane.b32.xlu0 %v658, 96
    %v662 = vpop.permute.xlu0 %661
    %v664 = vmul.f32 %v657, %v662
    %666 = vrot.lane.b32.xlu0 %v664, 16
    %v667 = vpop.permute.xlu0 %666
    %v669 = vadd.f32 %v659, %v667
    %v670 = vtanh.pop %v669
    %672 = vrot.lane.b32.xlu0 %v670, 32
    %v673 = vpop.permute.xlu0 %672
    %v675 = vmul.f32 %v657, %v673
    %677 = vrot.lane.b32.xlu0 %v675, 80
    %v678 = vpop.permute.xlu0 %677
    %v679 = vsel %vm177, %v678, 0
    %681 = vmatprep.subr.mxu0 0.0
    %682 = vmatpush1.msra.mxu0 0.0
    %683 = vmatprep.subr.mxu0 0.0
    %684 = vmatpush1.msra.mxu0 0.0
    %685 = vmatprep.subr.mxu0 0.0
    %686 = vmatpush1.msra.mxu0 0.0
    %687 = vmatprep.subr.mxu0 0.0
    %688 = vmatpush1.msra.mxu0 0.0
    %689 = vmatprep.subr.mxu0 0.0
    %690 = vmatpush1.msra.mxu0 0.0
    %691 = vmatprep.subr.mxu0 0.0
    %692 = vmatpush1.msra.mxu0 0.0
    %693 = vmatprep.subr.mxu0 0.0
    %694 = vmatpush1.msra.mxu0 0.0
    %695 = vmatprep.subr.mxu0 0.0
    %696 = vmatpush1.msra.mxu0 0.0
    %697 = vmatprep.subr.mxu0 0.0
    %698 = vmatpush1.msra.mxu0 0.0
    %699 = vmatprep.subr.mxu0 0.0
    %700 = vmatpush1.msra.mxu0 0.0
    %701 = vmatprep.subr.mxu0 0.0
    %702 = vmatpush1.msra.mxu0 0.0
    %703 = vmatprep.subr.mxu0 0.0
    %704 = vmatpush1.msra.mxu0 0.0
    %705 = vmatprep.subr.mxu0 0.0
    %706 = vmatpush1.msra.mxu0 0.0
    %707 = vmatprep.subr.mxu0 0.0
    %708 = vmatpush1.msra.mxu0 0.0
    %709 = vmatprep.subr.mxu0 0.0
    %710 = vmatpush1.msra.mxu0 %v33
    %711 = vmatprep.subr.mxu0 0.0
    %712 = vmatpush1.msra.mxu0 %v32
    %713 = vmatprep.subr.mxu0 0.0
    %714 = vmatpush2.msra.mxu0 0.0
    %715 = vmatprep.subr.mxu0 0.0
    %716 = vmatpush2.msra.mxu0 0.0
    %717 = vmatprep.subr.mxu0 0.0
    %718 = vmatpush2.msra.mxu0 0.0
    %719 = vmatprep.subr.mxu0 0.0
    %720 = vmatpush2.msra.mxu0 0.0
    %721 = vmatprep.subr.mxu0 0.0
    %722 = vmatpush2.msra.mxu0 0.0
    %723 = vmatprep.subr.mxu0 0.0
    %724 = vmatpush2.msra.mxu0 0.0
    %725 = vmatprep.subr.mxu0 0.0
    %726 = vmatpush2.msra.mxu0 0.0
    %727 = vmatprep.subr.mxu0 0.0
    %728 = vmatpush2.msra.mxu0 0.0
    %729 = vmatprep.subr.mxu0 0.0
    %730 = vmatpush2.msra.mxu0 0.0
    %731 = vmatprep.subr.mxu0 0.0
    %732 = vmatpush2.msra.mxu0 0.0
    %733 = vmatprep.subr.mxu0 0.0
    %734 = vmatpush2.msra.mxu0 0.0
    %735 = vmatprep.subr.mxu0 0.0
    %736 = vmatpush2.msra.mxu0 0.0
    %737 = vmatprep.subr.mxu0 0.0
    %738 = vmatpush2.msra.mxu0 0.0
    %739 = vmatprep.subr.mxu0 0.0
    %740 = vmatpush2.msra.mxu0 0.0
    %741 = vmatprep.subr.mxu0 0.0
    %742 = vmatpush2.msra.mxu0 0.0
    %743 = vmatprep.subr.mxu0 0.0
    %744 = vmatpush2.msra.mxu0 0.0
    %745 = vmatprep.mubr.f32.mxu0 0.0
    %746 = vmatmul.mubr.f32.gmra.mxu0 %v679
    %v747 = vpop.f32.mrf.mxu0
    %v748 = vadd.f32 0.0, %v747
    %v749 = vpop.f32.mrf.mxu0
    %750 = vdwg.mxu0
    %v751 = vadd.f32 %v164, %v748
    %v752 = vxor.u32 %v751, 2147483648
    %v753 = vmul.f32 %v752, 1.442695
    %v754 = vpow.pop %v753
    %v755 = vadd.f32 %v754, 1.0
    %v756 = vrcp.pop %v755
    %v757 = vmul.f32 1.0, %v756
    %v758 = vtanh.pop %v751
    %v759 = vmul.f32 %v757, %v669
    %761 = vrot.lane.b32.xlu0 %v758, 96
    %v762 = vpop.permute.xlu0 %761
    %v764 = vmul.f32 %v757, %v762
    %766 = vrot.lane.b32.xlu0 %v764, 16
    %v767 = vpop.permute.xlu0 %766
    %v769 = vadd.f32 %v759, %v767
    %v770 = vtanh.pop %v769
    %772 = vrot.lane.b32.xlu0 %v770, 32
    %v773 = vpop.permute.xlu0 %772
    %v775 = vmul.f32 %v757, %v773
    %777 = vrot.lane.b32.xlu0 %v775, 80
    %v778 = vpop.permute.xlu0 %777
    %v779 = vsel %vm177, %v778, 0
    %781 = vmatprep.subr.mxu0 0.0
    %782 = vmatpush1.msra.mxu0 0.0
    %783 = vmatprep.subr.mxu0 0.0
    %784 = vmatpush1.msra.mxu0 0.0
    %785 = vmatprep.subr.mxu0 0.0
    %786 = vmatpush1.msra.mxu0 0.0
    %787 = vmatprep.subr.mxu0 0.0
    %788 = vmatpush1.msra.mxu0 0.0
    %789 = vmatprep.subr.mxu0 0.0
    %790 = vmatpush1.msra.mxu0 0.0
    %791 = vmatprep.subr.mxu0 0.0
    %792 = vmatpush1.msra.mxu0 0.0
    %793 = vmatprep.subr.mxu0 0.0
    %794 = vmatpush1.msra.mxu0 0.0
    %795 = vmatprep.subr.mxu0 0.0
    %796 = vmatpush1.msra.mxu0 0.0
    %797 = vmatprep.subr.mxu0 0.0
    %798 = vmatpush1.msra.mxu0 0.0
    %799 = vmatprep.subr.mxu0 0.0
    %800 = vmatpush1.msra.mxu0 0.0
    %801 = vmatprep.subr.mxu0 0.0
    %802 = vmatpush1.msra.mxu0 0.0
    %803 = vmatprep.subr.mxu0 0.0
    %804 = vmatpush1.msra.mxu0 0.0
    %805 = vmatprep.subr.mxu0 0.0
    %806 = vmatpush1.msra.mxu0 0.0
    %807 = vmatprep.subr.mxu0 0.0
    %808 = vmatpush1.msra.mxu0 0.0
    %809 = vmatprep.subr.mxu0 0.0
    %810 = vmatpush1.msra.mxu0 %v33
    %811 = vmatprep.subr.mxu0 0.0
    %812 = vmatpush1.msra.mxu0 %v32
    %813 = vmatprep.subr.mxu0 0.0
    %814 = vmatpush2.msra.mxu0 0.0
    %815 = vmatprep.subr.mxu0 0.0
    %816 = vmatpush2.msra.mxu0 0.0
    %817 = vmatprep.subr.mxu0 0.0
    %818 = vmatpush2.msra.mxu0 0.0
    %819 = vmatprep.subr.mxu0 0.0
    %820 = vmatpush2.msra.mxu0 0.0
    %821 = vmatprep.subr.mxu0 0.0
    %822 = vmatpush2.msra.mxu0 0.0
    %823 = vmatprep.subr.mxu0 0.0
    %824 = vmatpush2.msra.mxu0 0.0
    %825 = vmatprep.subr.mxu0 0.0
    %826 = vmatpush2.msra.mxu0 0.0
    %827 = vmatprep.subr.mxu0 0.0
    %828 = vmatpush2.msra.mxu0 0.0
    %829 = vmatprep.subr.mxu0 0.0
    %830 = vmatpush2.msra.mxu0 0.0
    %831 = vmatprep.subr.mxu0 0.0
    %832 = vmatpush2.msra.mxu0 0.0
    %833 = vmatprep.subr.mxu0 0.0
    %834 = vmatpush2.msra.mxu0 0.0
    %835 = vmatprep.subr.mxu0 0.0
    %836 = vmatpush2.msra.mxu0 0.0
    %837 = vmatprep.subr.mxu0 0.0
    %838 = vmatpush2.msra.mxu0 0.0
    %839 = vmatprep.subr.mxu0 0.0
    %840 = vmatpush2.msra.mxu0 0.0
    %841 = vmatprep.subr.mxu0 0.0
    %842 = vmatpush2.msra.mxu0 0.0
    %843 = vmatprep.subr.mxu0 0.0
    %844 = vmatpush2.msra.mxu0 0.0
    %845 = vmatprep.mubr.f32.mxu0 0.0
    %846 = vmatmul.mubr.f32.gmra.mxu0 %v779
    %v847 = vpop.f32.mrf.mxu0
    %v848 = vadd.f32 0.0, %v847
    %v849 = vpop.f32.mrf.mxu0
    %850 = vdwg.mxu0
    %v851 = vadd.f32 %v169, %v848
    %v852 = vxor.u32 %v851, 2147483648
    %v853 = vmul.f32 %v852, 1.442695
    %v854 = vpow.pop %v853
    %v855 = vadd.f32 %v854, 1.0
    %v856 = vrcp.pop %v855
    %v857 = vmul.f32 1.0, %v856
    %v858 = vtanh.pop %v851
    %v859 = vmul.f32 %v857, %v769
    %861 = vrot.lane.b32.xlu0 %v858, 96
    %v862 = vpop.permute.xlu0 %861
    %v864 = vmul.f32 %v857, %v862
    %866 = vrot.lane.b32.xlu0 %v864, 16
    %v867 = vpop.permute.xlu0 %866
    %v869 = vadd.f32 %v859, %v867
    %v870 = vtanh.pop %v869
    %872 = vrot.lane.b32.xlu0 %v870, 32
    %v873 = vpop.permute.xlu0 %872
    %v875 = vmul.f32 %v857, %v873
    %877 = vrot.lane.b32.xlu0 %v875, 80
    %v878 = vpop.permute.xlu0 %877
    %v879 = vsel %vm177, %v878, 0
    %881 = vmatprep.subr.mxu0 0.0
    %882 = vmatpush1.msra.mxu0 0.0
    %883 = vmatprep.subr.mxu0 0.0
    %884 = vmatpush1.msra.mxu0 0.0
    %885 = vmatprep.subr.mxu0 0.0
    %886 = vmatpush1.msra.mxu0 0.0
    %887 = vmatprep.subr.mxu0 0.0
    %888 = vmatpush1.msra.mxu0 0.0
    %889 = vmatprep.subr.mxu0 0.0
    %890 = vmatpush1.msra.mxu0 0.0
    %891 = vmatprep.subr.mxu0 0.0
    %892 = vmatpush1.msra.mxu0 0.0
    %893 = vmatprep.subr.mxu0 0.0
    %894 = vmatpush1.msra.mxu0 0.0
    %895 = vmatprep.subr.mxu0 0.0
    %896 = vmatpush1.msra.mxu0 0.0
    %897 = vmatprep.subr.mxu0 0.0
    %898 = vmatpush1.msra.mxu0 0.0
    %899 = vmatprep.subr.mxu0 0.0
    %900 = vmatpush1.msra.mxu0 0.0
    %901 = vmatprep.subr.mxu0 0.0
    %902 = vmatpush1.msra.mxu0 0.0
    %903 = vmatprep.subr.mxu0 0.0
    %904 = vmatpush1.msra.mxu0 0.0
    %905 = vmatprep.subr.mxu0 0.0
    %906 = vmatpush1.msra.mxu0 0.0
    %907 = vmatprep.subr.mxu0 0.0
    %908 = vmatpush1.msra.mxu0 0.0
    %909 = vmatprep.subr.mxu0 0.0
    %910 = vmatpush1.msra.mxu0 %v33
    %911 = vmatprep.subr.mxu0 0.0
    %912 = vmatpush1.msra.mxu0 %v32
    %913 = vmatprep.subr.mxu0 0.0
    %914 = vmatpush2.msra.mxu0 0.0
    %915 = vmatprep.subr.mxu0 0.0
    %916 = vmatpush2.msra.mxu0 0.0
    %917 = vmatprep.subr.mxu0 0.0
    %918 = vmatpush2.msra.mxu0 0.0
    %919 = vmatprep.subr.mxu0 0.0
    %920 = vmatpush2.msra.mxu0 0.0
    %921 = vmatprep.subr.mxu0 0.0
    %922 = vmatpush2.msra.mxu0 0.0
    %923 = vmatprep.subr.mxu0 0.0
    %924 = vmatpush2.msra.mxu0 0.0
    %925 = vmatprep.subr.mxu0 0.0
    %926 = vmatpush2.msra.mxu0 0.0
    %927 = vmatprep.subr.mxu0 0.0
    %928 = vmatpush2.msra.mxu0 0.0
    %929 = vmatprep.subr.mxu0 0.0
    %930 = vmatpush2.msra.mxu0 0.0
    %931 = vmatprep.subr.mxu0 0.0
    %932 = vmatpush2.msra.mxu0 0.0
    %933 = vmatprep.subr.mxu0 0.0
    %934 = vmatpush2.msra.mxu0 0.0
    %935 = vmatprep.subr.mxu0 0.0
    %936 = vmatpush2.msra.mxu0 0.0
    %937 = vmatprep.subr.mxu0 0.0
    %938 = vmatpush2.msra.mxu0 0.0
    %939 = vmatprep.subr.mxu0 0.0
    %940 = vmatpush2.msra.mxu0 0.0
    %941 = vmatprep.subr.mxu0 0.0
    %942 = vmatpush2.msra.mxu0 0.0
    %943 = vmatprep.subr.mxu0 0.0
    %944 = vmatpush2.msra.mxu0 0.0
    %945 = vmatprep.mubr.f32.mxu0 0.0
    %946 = vmatmul.mubr.f32.gmra.mxu0 %v879
    %v947 = vpop.f32.mrf.mxu0
    %v948 = vadd.f32 0.0, %v947
    %v949 = vpop.f32.mrf.mxu0
    %950 = vdwg.mxu0
    %v951 = vadd.f32 %v174, %v948
    %v952 = vxor.u32 %v951, 2147483648
    %v953 = vmul.f32 %v952, 1.442695
    %v954 = vpow.pop %v953
    %v955 = vadd.f32 %v954, 1.0
    %v956 = vrcp.pop %v955
    %v957 = vmul.f32 1.0, %v956
    %v958 = vtanh.pop %v951
    %v959 = vmul.f32 %v957, %v869
    %961 = vrot.lane.b32.xlu0 %v958, 96
    %v962 = vpop.permute.xlu0 %961
    %v964 = vmul.f32 %v957, %v962
    %966 = vrot.lane.b32.xlu0 %v964, 16
    %v967 = vpop.permute.xlu0 %966
    %v969 = vadd.f32 %v959, %v967
    %v970 = vtanh.pop %v969
    %972 = vrot.lane.b32.xlu0 %v970, 32
    %v973 = vpop.permute.xlu0 %972
    %v975 = vmul.f32 %v957, %v973
    %v976 = vld [vmem:[%s1] sm:$0x3]
    %v977 = vld [vmem:[#allocation2 + $0x20] sm:$0xff]
    %v978 = vld [vmem:[#allocation2 + $0x28] sm:$0xff]
    %v979 = vld [vmem:[#allocation2 + $0x30] sm:$0xf]
    %vm980 = vcmask 31744
    %v982 = vsel %vm980, %v976, 0
    %vm984 = vcmask 1043456
    %v986 = vsel %vm984, %v979, 0
    %988 = vmatprep.subr.mxu0 0.0
    %989 = vmatpush1.msra.mxu0 0.0
    %990 = vmatprep.subr.mxu0 0.0
    %991 = vmatpush1.msra.mxu0 0.0
    %992 = vmatprep.subr.mxu0 0.0
    %993 = vmatpush1.msra.mxu0 0.0
    %994 = vmatprep.subr.mxu0 0.0
    %995 = vmatpush1.msra.mxu0 0.0
    %996 = vmatprep.subr.mxu0 0.0
    %997 = vmatpush1.msra.mxu0 0.0
    %998 = vmatprep.subr.mxu0 0.0
    %999 = vmatpush1.msra.mxu0 0.0
    %1000 = vmatprep.subr.mxu0 0.0
    %1001 = vmatpush1.msra.mxu0 0.0
    %1002 = vmatprep.subr.mxu0 0.0
    %1003 = vmatpush1.msra.mxu0 0.0
    %1004 = vmatprep.subr.mxu0 0.0
    %1005 = vmatpush1.msra.mxu0 0.0
    %1006 = vmatprep.subr.mxu0 0.0
    %1007 = vmatpush1.msra.mxu0 0.0
    %1008 = vmatprep.subr.mxu0 0.0
    %1009 = vmatpush1.msra.mxu0 0.0
    %1010 = vmatprep.subr.mxu0 0.0
    %1011 = vmatpush1.msra.mxu0 0.0
    %1012 = vmatprep.subr.mxu0 0.0
    %1013 = vmatpush1.msra.mxu0 0.0
    %1014 = vmatprep.subr.mxu0 0.0
    %1015 = vmatpush1.msra.mxu0 0.0
    %1016 = vmatprep.subr.mxu0 0.0
    %1017 = vmatpush1.msra.mxu0 0.0
    %1018 = vmatprep.subr.mxu0 0.0
    %1019 = vmatpush1.msra.mxu0 %v986
    %1020 = vmatprep.subr.mxu0 0.0
    %1021 = vmatpush2.msra.mxu0 0.0
    %1022 = vmatprep.subr.mxu0 0.0
    %1023 = vmatpush2.msra.mxu0 0.0
    %1024 = vmatprep.subr.mxu0 0.0
    %1025 = vmatpush2.msra.mxu0 0.0
    %1026 = vmatprep.subr.mxu0 0.0
    %1027 = vmatpush2.msra.mxu0 0.0
    %1028 = vmatprep.subr.mxu0 0.0
    %1029 = vmatpush2.msra.mxu0 0.0
    %1030 = vmatprep.subr.mxu0 0.0
    %1031 = vmatpush2.msra.mxu0 0.0
    %1032 = vmatprep.subr.mxu0 0.0
    %1033 = vmatpush2.msra.mxu0 0.0
    %1034 = vmatprep.subr.mxu0 0.0
    %1035 = vmatpush2.msra.mxu0 0.0
    %1036 = vmatprep.subr.mxu0 0.0
    %1037 = vmatpush2.msra.mxu0 0.0
    %1038 = vmatprep.subr.mxu0 0.0
    %1039 = vmatpush2.msra.mxu0 0.0
    %1040 = vmatprep.subr.mxu0 0.0
    %1041 = vmatpush2.msra.mxu0 0.0
    %1042 = vmatprep.subr.mxu0 0.0
    %1043 = vmatpush2.msra.mxu0 0.0
    %1044 = vmatprep.subr.mxu0 0.0
    %1045 = vmatpush2.msra.mxu0 0.0
    %1046 = vmatprep.subr.mxu0 0.0
    %1047 = vmatpush2.msra.mxu0 0.0
    %1048 = vmatprep.subr.mxu0 0.0
    %1049 = vmatpush2.msra.mxu0 0.0
    %1050 = vmatprep.subr.mxu0 0.0
    %1051 = vmatpush2.msra.mxu0 0.0
    %1052 = vmatprep.mubr.f32.mxu0 0.0
    %1053 = vmatmul.mubr.f32.gmra.mxu0 %v982
    %v1054 = vpop.f32.mrf.mxu0
    %v1055 = vadd.f32 0.0, %v1054
    %v1056 = vpop.f32.mrf.mxu0
    %1057 = vdwg.mxu0
    %1059 = vrot.lane.b32.xlu0 %v975, 80
    %v1060 = vpop.permute.xlu0 %1059
    %v1061 = vsel %vm177, %v1060, 0
    %1063 = vmatprep.subr.mxu0 0.0
    %1064 = vmatpush1.msra.mxu0 0.0
    %1065 = vmatprep.subr.mxu0 0.0
    %1066 = vmatpush1.msra.mxu0 0.0
    %1067 = vmatprep.subr.mxu0 0.0
    %1068 = vmatpush1.msra.mxu0 0.0
    %1069 = vmatprep.subr.mxu0 0.0
    %1070 = vmatpush1.msra.mxu0 0.0
    %1071 = vmatprep.subr.mxu0 0.0
    %1072 = vmatpush1.msra.mxu0 0.0
    %1073 = vmatprep.subr.mxu0 0.0
    %1074 = vmatpush1.msra.mxu0 0.0
    %1075 = vmatprep.subr.mxu0 0.0
    %1076 = vmatpush1.msra.mxu0 0.0
    %1077 = vmatprep.subr.mxu0 0.0
    %1078 = vmatpush1.msra.mxu0 0.0
    %1079 = vmatprep.subr.mxu0 0.0
    %1080 = vmatpush1.msra.mxu0 0.0
    %1081 = vmatprep.subr.mxu0 0.0
    %1082 = vmatpush1.msra.mxu0 0.0
    %1083 = vmatprep.subr.mxu0 0.0
    %1084 = vmatpush1.msra.mxu0 0.0
    %1085 = vmatprep.subr.mxu0 0.0
    %1086 = vmatpush1.msra.mxu0 0.0
    %1087 = vmatprep.subr.mxu0 0.0
    %1088 = vmatpush1.msra.mxu0 0.0
    %1089 = vmatprep.subr.mxu0 0.0
    %1090 = vmatpush1.msra.mxu0 0.0
    %1091 = vmatprep.subr.mxu0 0.0
    %1092 = vmatpush1.msra.mxu0 %v978
    %1093 = vmatprep.subr.mxu0 0.0
    %1094 = vmatpush1.msra.mxu0 %v977
    %1095 = vmatprep.subr.mxu0 0.0
    %1096 = vmatpush2.msra.mxu0 0.0
    %1097 = vmatprep.subr.mxu0 0.0
    %1098 = vmatpush2.msra.mxu0 0.0
    %1099 = vmatprep.subr.mxu0 0.0
    %1100 = vmatpush2.msra.mxu0 0.0
    %1101 = vmatprep.subr.mxu0 0.0
    %1102 = vmatpush2.msra.mxu0 0.0
    %1103 = vmatprep.subr.mxu0 0.0
    %1104 = vmatpush2.msra.mxu0 0.0
    %1105 = vmatprep.subr.mxu0 0.0
    %1106 = vmatpush2.msra.mxu0 0.0
    %1107 = vmatprep.subr.mxu0 0.0
    %1108 = vmatpush2.msra.mxu0 0.0
    %1109 = vmatprep.subr.mxu0 0.0
    %1110 = vmatpush2.msra.mxu0 0.0
    %1111 = vmatprep.subr.mxu0 0.0
    %1112 = vmatpush2.msra.mxu0 0.0
    %1113 = vmatprep.subr.mxu0 0.0
    %1114 = vmatpush2.msra.mxu0 0.0
    %1115 = vmatprep.subr.mxu0 0.0
    %1116 = vmatpush2.msra.mxu0 0.0
    %1117 = vmatprep.subr.mxu0 0.0
    %1118 = vmatpush2.msra.mxu0 0.0
    %1119 = vmatprep.subr.mxu0 0.0
    %1120 = vmatpush2.msra.mxu0 0.0
    %1121 = vmatprep.subr.mxu0 0.0
    %1122 = vmatpush2.msra.mxu0 0.0
    %1123 = vmatprep.subr.mxu0 0.0
    %1124 = vmatpush2.msra.mxu0 0.0
    %1125 = vmatprep.subr.mxu0 0.0
    %1126 = vmatpush2.msra.mxu0 0.0
    %1127 = vmatprep.mubr.f32.mxu0 0.0
    %1128 = vmatmul.mubr.f32.gmra.mxu0 %v1061
    %v1129 = vpop.f32.mrf.mxu0
    %v1130 = vadd.f32 %v1055, %v1129
    %v1131 = vpop.f32.mrf.mxu0
    %1132 = vdwg.mxu0
    %v1133 = vld [vmem:[#allocation2 + $0x38] sm:$0x1]
    %v1134 = vlaneseq
    %v1135 = vshrl.u32 %v1134, 7
    %v1136 = vsub.s32 0, %v1135
    %v1137 = vrot.slane %v1133, %v1136
    %v1138 = vadd.f32 %v1130, %v1137
    %v1139 = vmax.f32 %v1138, 0.0
    %v1140 = vld [vmem:[#allocation2 + $0x40] sm:$0xff]
    %v1141 = vld [vmem:[#allocation2 + $0x48] sm:$0xff]
    %v1142 = vld [vmem:[#allocation2 + $0x50] sm:$0xff]
    %v1143 = vld [vmem:[#allocation2 + $0x58] sm:$0xff]
    %v1144 = vld [vmem:[#allocation2 + $0x60] sm:$0xff]
    %v1145 = vld [vmem:[#allocation2 + $0x68] sm:$0x1]
    %v1146 = vlaneseq
    %v1147 = vshrl.u32 %v1146, 7
    %v1148 = vsub.s32 0, %v1147
    %v1149 = vrot.slane %v1145, %v1148
    %vm1150 = vcmask 326656
    %v1152 = vsel %vm1150, %v1139, 0
    %1154 = vmatprep.subr.mxu0 0.0
    %1155 = vmatpush1.msra.mxu0 0.0
    %1156 = vmatprep.subr.mxu0 0.0
    %1157 = vmatpush1.msra.mxu0 0.0
    %1158 = vmatprep.subr.mxu0 0.0
    %1159 = vmatpush1.msra.mxu0 0.0
    %1160 = vmatprep.subr.mxu0 0.0
    %1161 = vmatpush1.msra.mxu0 0.0
    %1162 = vmatprep.subr.mxu0 0.0
    %1163 = vmatpush1.msra.mxu0 0.0
    %1164 = vmatprep.subr.mxu0 0.0
    %1165 = vmatpush1.msra.mxu0 0.0
    %1166 = vmatprep.subr.mxu0 0.0
    %1167 = vmatpush1.msra.mxu0 0.0
    %1168 = vmatprep.subr.mxu0 0.0
    %1169 = vmatpush1.msra.mxu0 0.0
    %1170 = vmatprep.subr.mxu0 0.0
    %1171 = vmatpush1.msra.mxu0 0.0
    %1172 = vmatprep.subr.mxu0 0.0
    %1173 = vmatpush1.msra.mxu0 0.0
    %1174 = vmatprep.subr.mxu0 0.0
    %1175 = vmatpush1.msra.mxu0 0.0
    %1176 = vmatprep.subr.mxu0 0.0
    %1177 = vmatpush1.msra.mxu0 %v1144
    %1178 = vmatprep.subr.mxu0 0.0
    %1179 = vmatpush1.msra.mxu0 %v1143
    %1180 = vmatprep.subr.mxu0 0.0
    %1181 = vmatpush1.msra.mxu0 %v1142
    %1182 = vmatprep.subr.mxu0 0.0
    %1183 = vmatpush1.msra.mxu0 %v1141
    %1184 = vmatprep.subr.mxu0 0.0
    %1185 = vmatpush1.msra.mxu0 %v1140
    %1186 = vmatprep.subr.mxu0 0.0
    %1187 = vmatpush2.msra.mxu0 0.0
    %1188 = vmatprep.subr.mxu0 0.0
    %1189 = vmatpush2.msra.mxu0 0.0
    %1190 = vmatprep.subr.mxu0 0.0
    %1191 = vmatpush2.msra.mxu0 0.0
    %1192 = vmatprep.subr.mxu0 0.0
    %1193 = vmatpush2.msra.mxu0 0.0
    %1194 = vmatprep.subr.mxu0 0.0
    %1195 = vmatpush2.msra.mxu0 0.0
    %1196 = vmatprep.subr.mxu0 0.0
    %1197 = vmatpush2.msra.mxu0 0.0
    %1198 = vmatprep.subr.mxu0 0.0
    %1199 = vmatpush2.msra.mxu0 0.0
    %1200 = vmatprep.subr.mxu0 0.0
    %1201 = vmatpush2.msra.mxu0 0.0
    %1202 = vmatprep.subr.mxu0 0.0
    %1203 = vmatpush2.msra.mxu0 0.0
    %1204 = vmatprep.subr.mxu0 0.0
    %1205 = vmatpush2.msra.mxu0 0.0
    %1206 = vmatprep.subr.mxu0 0.0
    %1207 = vmatpush2.msra.mxu0 0.0
    %1208 = vmatprep.subr.mxu0 0.0
    %1209 = vmatpush2.msra.mxu0 0.0
    %1210 = vmatprep.subr.mxu0 0.0
    %1211 = vmatpush2.msra.mxu0 0.0
    %1212 = vmatprep.subr.mxu0 0.0
    %1213 = vmatpush2.msra.mxu0 0.0
    %1214 = vmatprep.subr.mxu0 0.0
    %1215 = vmatpush2.msra.mxu0 0.0
    %1216 = vmatprep.subr.mxu0 0.0
    %1217 = vmatpush2.msra.mxu0 0.0
    %1218 = vmatprep.mubr.f32.mxu0 0.0
    %1219 = vmatmul.mubr.f32.gmra.mxu0 %v1152
    %v1220 = vpop.f32.mrf.mxu0
    %v1221 = vadd.f32 %v1149, %v1220
    %v1222 = vpop.f32.mrf.mxu0
    %1223 = vdwg.mxu0
    %v1224 = vmax.f32 %v1221, 0.0
    %v1225 = vld [vmem:[#allocation2 + $0x70] sm:$0xff]
    %v1226 = vld [vmem:[#allocation2 + $0x78] sm:$0xff]
    %v1227 = vld [vmem:[#allocation2 + $0x80] sm:$0xff]
    %v1228 = vld [vmem:[#allocation2 + $0x88] sm:$0xff]
    %v1229 = vld [vmem:[#allocation2 + $0x90] sm:$0xff]
    %v1230 = vld [vmem:[#allocation2 + $0x98] sm:$0x1]
    %v1231 = vlaneseq
    %v1232 = vshrl.u32 %v1231, 7
    %v1233 = vsub.s32 0, %v1232
    %v1234 = vrot.slane %v1230, %v1233
    %v1236 = vsel %vm1150, %v1224, 0
    %1238 = vmatprep.subr.mxu0 0.0
    %1239 = vmatpush1.msra.mxu0 0.0
    %1240 = vmatprep.subr.mxu0 0.0
    %1241 = vmatpush1.msra.mxu0 0.0
    %1242 = vmatprep.subr.mxu0 0.0
    %1243 = vmatpush1.msra.mxu0 0.0
    %1244 = vmatprep.subr.mxu0 0.0
    %1245 = vmatpush1.msra.mxu0 0.0
    %1246 = vmatprep.subr.mxu0 0.0
    %1247 = vmatpush1.msra.mxu0 0.0
    %1248 = vmatprep.subr.mxu0 0.0
    %1249 = vmatpush1.msra.mxu0 0.0
    %1250 = vmatprep.subr.mxu0 0.0
    %1251 = vmatpush1.msra.mxu0 0.0
    %1252 = vmatprep.subr.mxu0 0.0
    %1253 = vmatpush1.msra.mxu0 0.0
    %1254 = vmatprep.subr.mxu0 0.0
    %1255 = vmatpush1.msra.mxu0 0.0
    %1256 = vmatprep.subr.mxu0 0.0
    %1257 = vmatpush1.msra.mxu0 0.0
    %1258 = vmatprep.subr.mxu0 0.0
    %1259 = vmatpush1.msra.mxu0 0.0
    %1260 = vmatprep.subr.mxu0 0.0
    %1261 = vmatpush1.msra.mxu0 %v1229
    %1262 = vmatprep.subr.mxu0 0.0
    %1263 = vmatpush1.msra.mxu0 %v1228
    %1264 = vmatprep.subr.mxu0 0.0
    %1265 = vmatpush1.msra.mxu0 %v1227
    %1266 = vmatprep.subr.mxu0 0.0
    %1267 = vmatpush1.msra.mxu0 %v1226
    %1268 = vmatprep.subr.mxu0 0.0
    %1269 = vmatpush1.msra.mxu0 %v1225
    %1270 = vmatprep.subr.mxu0 0.0
    %1271 = vmatpush2.msra.mxu0 0.0
    %1272 = vmatprep.subr.mxu0 0.0
    %1273 = vmatpush2.msra.mxu0 0.0
    %1274 = vmatprep.subr.mxu0 0.0
    %1275 = vmatpush2.msra.mxu0 0.0
    %1276 = vmatprep.subr.mxu0 0.0
    %1277 = vmatpush2.msra.mxu0 0.0
    %1278 = vmatprep.subr.mxu0 0.0
    %1279 = vmatpush2.msra.mxu0 0.0
    %1280 = vmatprep.subr.mxu0 0.0
    %1281 = vmatpush2.msra.mxu0 0.0
    %1282 = vmatprep.subr.mxu0 0.0
    %1283 = vmatpush2.msra.mxu0 0.0
    %1284 = vmatprep.subr.mxu0 0.0
    %1285 = vmatpush2.msra.mxu0 0.0
    %1286 = vmatprep.subr.mxu0 0.0
    %1287 = vmatpush2.msra.mxu0 0.0
    %1288 = vmatprep.subr.mxu0 0.0
    %1289 = vmatpush2.msra.mxu0 0.0
    %1290 = vmatprep.subr.mxu0 0.0
    %1291 = vmatpush2.msra.mxu0 0.0
    %1292 = vmatprep.subr.mxu0 0.0
    %1293 = vmatpush2.msra.mxu0 0.0
    %1294 = vmatprep.subr.mxu0 0.0
    %1295 = vmatpush2.msra.mxu0 0.0
    %1296 = vmatprep.subr.mxu0 0.0
    %1297 = vmatpush2.msra.mxu0 0.0
    %1298 = vmatprep.subr.mxu0 0.0
    %1299 = vmatpush2.msra.mxu0 0.0
    %1300 = vmatprep.subr.mxu0 0.0
    %1301 = vmatpush2.msra.mxu0 0.0
    %1302 = vmatprep.mubr.f32.mxu0 0.0
    %1303 = vmatmul.mubr.f32.gmra.mxu0 %v1236
    %v1304 = vpop.f32.mrf.mxu0
    %v1305 = vadd.f32 %v1234, %v1304
    %v1306 = vpop.f32.mrf.mxu0
    %1307 = vdwg.mxu0
    %v1308 = vmax.f32 %v1305, 0.0
    %v1309 = vld [vmem:[#allocation2 + $0xa0] sm:$0xff]
    %v1310 = vld [vmem:[#allocation2 + $0xa8] sm:$0xff]
    %v1311 = vld [vmem:[#allocation2 + $0xb0] sm:$0xff]
    %v1312 = vld [vmem:[#allocation2 + $0xb8] sm:$0xff]
    %v1313 = vld [vmem:[#allocation2 + $0xc0] sm:$0xff]
    %v1314 = vld [vmem:[#allocation2 + $0xc8] sm:$0x1]
    %v1315 = vlaneseq
    %v1316 = vshrl.u32 %v1315, 7
    %v1317 = vsub.s32 0, %v1316
    %v1318 = vrot.slane %v1314, %v1317
    %v1320 = vsel %vm1150, %v1308, 0
    %1322 = vmatprep.subr.mxu0 0.0
    %1323 = vmatpush1.msra.mxu0 0.0
    %1324 = vmatprep.subr.mxu0 0.0
    %1325 = vmatpush1.msra.mxu0 0.0
    %1326 = vmatprep.subr.mxu0 0.0
    %1327 = vmatpush1.msra.mxu0 0.0
    %1328 = vmatprep.subr.mxu0 0.0
    %1329 = vmatpush1.msra.mxu0 0.0
    %1330 = vmatprep.subr.mxu0 0.0
    %1331 = vmatpush1.msra.mxu0 0.0
    %1332 = vmatprep.subr.mxu0 0.0
    %1333 = vmatpush1.msra.mxu0 0.0
    %1334 = vmatprep.subr.mxu0 0.0
    %1335 = vmatpush1.msra.mxu0 0.0
    %1336 = vmatprep.subr.mxu0 0.0
    %1337 = vmatpush1.msra.mxu0 0.0
    %1338 = vmatprep.subr.mxu0 0.0
    %1339 = vmatpush1.msra.mxu0 0.0
    %1340 = vmatprep.subr.mxu0 0.0
    %1341 = vmatpush1.msra.mxu0 0.0
    %1342 = vmatprep.subr.mxu0 0.0
    %1343 = vmatpush1.msra.mxu0 0.0
    %1344 = vmatprep.subr.mxu0 0.0
    %1345 = vmatpush1.msra.mxu0 %v1313
    %1346 = vmatprep.subr.mxu0 0.0
    %1347 = vmatpush1.msra.mxu0 %v1312
    %1348 = vmatprep.subr.mxu0 0.0
    %1349 = vmatpush1.msra.mxu0 %v1311
    %1350 = vmatprep.subr.mxu0 0.0
    %1351 = vmatpush1.msra.mxu0 %v1310
    %1352 = vmatprep.subr.mxu0 0.0
    %1353 = vmatpush1.msra.mxu0 %v1309
    %1354 = vmatprep.subr.mxu0 0.0
    %1355 = vmatpush2.msra.mxu0 0.0
    %1356 = vmatprep.subr.mxu0 0.0
    %1357 = vmatpush2.msra.mxu0 0.0
    %1358 = vmatprep.subr.mxu0 0.0
    %1359 = vmatpush2.msra.mxu0 0.0
    %1360 = vmatprep.subr.mxu0 0.0
    %1361 = vmatpush2.msra.mxu0 0.0
    %1362 = vmatprep.subr.mxu0 0.0
    %1363 = vmatpush2.msra.mxu0 0.0
    %1364 = vmatprep.subr.mxu0 0.0
    %1365 = vmatpush2.msra.mxu0 0.0
    %1366 = vmatprep.subr.mxu0 0.0
    %1367 = vmatpush2.msra.mxu0 0.0
    %1368 = vmatprep.subr.mxu0 0.0
    %1369 = vmatpush2.msra.mxu0 0.0
    %1370 = vmatprep.subr.mxu0 0.0
    %1371 = vmatpush2.msra.mxu0 0.0
    %1372 = vmatprep.subr.mxu0 0.0
    %1373 = vmatpush2.msra.mxu0 0.0
    %1374 = vmatprep.subr.mxu0 0.0
    %1375 = vmatpush2.msra.mxu0 0.0
    %1376 = vmatprep.subr.mxu0 0.0
    %1377 = vmatpush2.msra.mxu0 0.0
    %1378 = vmatprep.subr.mxu0 0.0
    %1379 = vmatpush2.msra.mxu0 0.0
    %1380 = vmatprep.subr.mxu0 0.0
    %1381 = vmatpush2.msra.mxu0 0.0
    %1382 = vmatprep.subr.mxu0 0.0
    %1383 = vmatpush2.msra.mxu0 0.0
    %1384 = vmatprep.subr.mxu0 0.0
    %1385 = vmatpush2.msra.mxu0 0.0
    %1386 = vmatprep.mubr.f32.mxu0 0.0
    %1387 = vmatmul.mubr.f32.gmra.mxu0 %v1320
    %v1388 = vpop.f32.mrf.mxu0
    %v1389 = vadd.f32 %v1318, %v1388
    %v1390 = vpop.f32.mrf.mxu0
    %1391 = vdwg.mxu0
    %v1392 = vmax.f32 %v1389, -20.0
    %v1393 = vmin.f32 %v1392, 2.0
    %v1394 = vmul.f32 %v1393, 1.442695
    %v1395 = vpow.pop %v1394
    %v1396 = vld [vmem:[%s2] sm:$0x3]
    %1398 = vrot.lane.b32.xlu0 %v1396, 2
    %v1399 = vpop.permute.xlu0 %1398
    %v1401 = vmul.f32 %v1395, %v1399
    %1403 = vrot.lane.b32.xlu0 %v1401, 126
    %v1404 = vpop.permute.xlu0 %1403
    %v1406 = vadd.f32 %v1389, %v1404
    %v1407 = vtanh.pop %v1406
    %v1408 = vlaneseq
    %v1409 = vshrl.u32 %v1408, 7
    %v1410 = vsub.s32 0, %v1409
    %v1411 = vrot.slane %v1406, %v1410
    %v1412 = vsub.f32 %v1411, %v1389
    %v1413 = vmul.f32 %v1412, %v1412
    %v1414 = vsub.f32 0.0, %v1413
    %v1415 = vmul.f32 %v1395, 2.0
    %v1416 = vmul.f32 %v1415, %v1395
    %1418 = vrot.lane.b32.xlu0 %v1416, 126
    %v1419 = vpop.permute.xlu0 %1418
    %v1421 = vrcp.pop %v1419
    %v1422 = vmul.f32 %v1414, %v1421
    %1424 = vrot.lane.b32.xlu0 %v1393, 126
    %v1425 = vpop.permute.xlu0 %1424
    %v1427 = vsub.f32 %v1422, %v1425
    %v1428 = vsub.f32 %v1427, 0.9189385
    %v1429 = vsub.f32 0.6931472, %v1406
    %v1430 = vmul.f32 %v1406, -2.0
    %v1431 = vmax.f32 %v1430, 0.0
    %v1432 = vand.u32 2147483647, %v1430
    %v1433 = vsub.f32 0.0, %v1432
    %v1434 = vmul.f32 %v1433, 1.442695
    %v1435 = vpow.pop %v1434
    %v1436 = vadd.f32 %v1435, 1.0
    %v1437 = vlog2.pop %v1436
    %v1438 = vmul.f32 %v1437, 0.6931472
    %v1439 = vadd.f32 %v1431, %v1438
    %v1440 = vsub.f32 %v1429, %v1439
    %v1441 = vmul.f32 %v1440, 2.0
    %v1442 = vlaneseq
    %v1443 = vshrl.u32 %v1442, 7
    %v1444 = vsub.s32 0, %v1443
    %v1445 = vrot.slane %v1441, %v1444
    %v1446 = vsub.f32 %v1428, %v1445
    %vm1447 = vcmask 9216
    %1448 = vst.msk [vmem:[%s4] sm:$0x3] %vm1447, %v1389
    %vm1449 = vcmask 25616
    %1450 = vst.msk [vmem:[%s4] sm:$0x3] %vm1449, %v1395
    %1452 = vrot.lane.b32.xlu0 %v1407, 4
    %v1453 = vpop.permute.xlu0 %1452
    %vm1455 = vcmask 42016
    %1456 = vst.msk [vmem:[%s4] sm:$0x3] %vm1455, %v1453
    %1458 = vrot.lane.b32.xlu0 %v1446, 6
    %v1459 = vpop.permute.xlu0 %1458
    %vm1461 = vcmask 58416
    %1462 = vst.msk [vmem:[%s4] sm:$0x3] %vm1461, %v1459
    // Predicated region
    $region22: #{forward.1} parent=1 // pred_check
      _
    $region23: #{forward.1} parent=1 // pred_check_branch
      %1464 = sbr.rel (0) target = $region25
    $region24: #{forward.1} parent=1 // pred_region
      _
    $region25: #{forward.1} parent=1 // pred_fallthru
      _
    // Predicated region
    $region26: #{forward.1} parent=1 // pred_check
      _
    $region27: #{forward.1} parent=1 // pred_check_branch
      %1466 = sbr.rel (0) target = $region29
    $region28: #{forward.1} parent=1 // pred_region
      _
    $region29: #{forward.1} parent=1 // pred_fallthru
      _
    %1467 = vsyncpa [#allocation3], 1

</llo_original>
